<compile_context>
chip_gen: v7x
topology: tpu7x:2x2x1
jax: 0.10.0
libtpu: 0.0.40
codegen_flags: <defaults>
</compile_context>

<pallas_src>
import functools
import math

import jax
import jax.numpy as jnp
from jax import lax
from jax.experimental import pallas as pl
from jax.experimental.pallas import tpu as pltpu

_DN = (((1,), (1,)), ((), ()))   # contract last dims of both operands: x @ W.T, Q @ K.T
_LANE = 128


def _ceil_to(n, m):
    return ((n + m - 1) // m) * m


def _pad2d(x, rows, cols):
    r, c = x.shape
    if r == rows and c == cols:
        return x
    return jnp.pad(x, ((0, rows - r), (0, cols - c)))


def _row_tile(padded_rows):
    """Row tile for a row count that is a multiple of 128.

    Prefers >=2 tiles (so ("parallel",) can shard across v7x's two TensorCores)
    and 128/256-row MXU-friendly tiles."""
    if padded_rows >= 512 and padded_rows % 256 == 0:
        return 256
    if padded_rows >= 256:
        return 128
    return padded_rows   # == 128 (or less, full dim)


def _const_spec(shape):
    """Constant-index operand (fetched once per core): single-buffer it to save VMEM."""
    try:
        return pl.BlockSpec(shape, lambda i: (0, 0), pipeline_mode=pl.Buffered(1))
    except (TypeError, AttributeError):   # older jax without pipeline_mode / Buffered
        return pl.BlockSpec(shape, lambda i: (0, 0))


def _vmem_limit_bytes():
    try:
        kind = jax.devices()[0].device_kind.lower()
    except Exception:
        kind = ""
    if "v7" in kind or "7x" in kind:
        return 48 * 1024 * 1024     # v7x: 64 MiB physical VMEM per TensorCore
    return 96 * 1024 * 1024         # v5e / v6e: 128 MiB physical VMEM


# -----------------------------------------------------------------------------
# Fused K / V projection: one pallas_call, two outputs (x @ Wk.T, x @ Wv.T).
# -----------------------------------------------------------------------------
def _kv_proj_kernel(*refs, shared):
    it = iter(refs)
    if shared:                       # key is value: read the input rows from HBM once
        x = next(it)[...]
        kx = vx = x
    else:
        kx = next(it)[...]
        vx = next(it)[...]
    wk_ref = next(it)
    wv_ref = next(it)
    k_ref = next(it)
    v_ref = next(it)
    k_ref[...] = lax.dot_general(kx, wk_ref[...], _DN,
                                 preferred_element_type=jnp.float32).astype(k_ref.dtype)
    v_ref[...] = lax.dot_general(vx, wv_ref[...], _DN,
                                 preferred_element_type=jnp.float32).astype(v_ref.dtype)


def _project_kv(kx_p, vx_p, wk_p, wv_p, *, shared, out_dtype, vmem_limit):
    skv_p, hp = kx_p.shape
    tkv = _row_tile(skv_p)
    itemsize = int(jnp.dtype(out_dtype).itemsize)

    in_specs = [pl.BlockSpec((tkv, hp), lambda i: (i, 0))]
    inputs = [kx_p]
    if not shared:
        in_specs.append(pl.BlockSpec((tkv, hp), lambda i: (i, 0)))
        inputs.append(vx_p)
    in_specs += [_const_spec((hp, hp)), _const_spec((hp, hp))]
    inputs += [wk_p, wv_p]

    n_reads = 1 if shared else 2
    return pl.pallas_call(
        functools.partial(_kv_proj_kernel, shared=shared),
        out_shape=(jax.ShapeDtypeStruct((skv_p, hp), out_dtype),
                   jax.ShapeDtypeStruct((skv_p, hp), out_dtype)),
        grid=(skv_p // tkv,),
        in_specs=in_specs,
        out_specs=(pl.BlockSpec((tkv, hp), lambda i: (i, 0)),
                   pl.BlockSpec((tkv, hp), lambda i: (i, 0))),
        compiler_params=pltpu.CompilerParams(
            dimension_semantics=("parallel",),
            vmem_limit_bytes=vmem_limit,
        ),
        cost_estimate=pl.CostEstimate(
            flops=4 * skv_p * hp * hp,
            transcendentals=0,
            bytes_accessed=(n_reads * skv_p * hp + 2 * hp * hp + 2 * skv_p * hp) * itemsize,
        ),
    )(*inputs)


# -----------------------------------------------------------------------------
# Attention: fused Q (and optionally K/V) projection + masked softmax + attn @ V.
# -----------------------------------------------------------------------------
def _attention_kernel(*refs, inv_scale, skv_valid, causal, has_mask,
                      project_kv, shared_kv, return_attn):
    it = iter(refs)
    q_ref = next(it)
    wq_ref = next(it)
    if project_kv:
        if shared_kv:
            kvx_ref = next(it); wk_ref = next(it); wv_ref = next(it)
        else:
            kx_ref = next(it); wk_ref = next(it)
            vx_ref = next(it); wv_ref = next(it)
    else:
        k_ref = next(it)
        v_ref = next(it)
    mask_ref = next(it) if has_mask else None
    x_ref = next(it)
    attn_ref = next(it) if return_attn else None

    qx = q_ref[...]
    in_dtype = qx.dtype

    # Q projection fused per query tile; 1/sqrt(H) folded into the small [tq, H] tile.
    q = (lax.dot_general(qx, wq_ref[...], _DN, preferred_element_type=jnp.float32)
         * inv_scale).astype(in_dtype)

    if project_kv:
        # Single-tile grids: project K/V right here -> no HBM roundtrip for K_proj/V_proj.
        if shared_kv:
            kx = vx = kvx_ref[...]
        else:
            kx = kx_ref[...]
            vx = vx_ref[...]
        k = lax.dot_general(kx, wk_ref[...], _DN,
                            preferred_element_type=jnp.float32).astype(in_dtype)
        v = lax.dot_general(vx, wv_ref[...], _DN,
                            preferred_element_type=jnp.float32).astype(in_dtype)
    else:
        k = k_ref[...]
        v = v_ref[...]

    # energy = Q @ K^T: contract last dims directly, no explicit transpose (no XLU work).
    energy = lax.dot_general(q, k, _DN, preferred_element_type=jnp.float32)

    tq_rows, skv_pad = energy.shape
    col = lax.broadcasted_iota(jnp.int32, (tq_rows, skv_pad), 1)

    keep = None
    if causal:
        row = (lax.broadcasted_iota(jnp.int32, (tq_rows, skv_pad), 0)
               + pl.program_id(0) * tq_rows)
        keep = row >= col
    if has_mask:
        user_keep = mask_ref[...].astype(jnp.int32) != 0
        keep = user_keep if keep is None else jnp.logical_and(keep, user_keep)
    if keep is not None:
        energy = jnp.where(keep, energy, jnp.float32(-1e10))   # masked_fill(mask == 0, -1e10)
    if skv_pad > skv_valid:
        # Padded key columns must carry exactly zero probability.
        energy = jnp.where(col < skv_valid, energy, jnp.float32(float("-inf")))

    # Numerically stable softmax; denominator reciprocal goes to the (idle) EUP slot.
    m = jnp.max(energy, axis=-1, keepdims=True)
    e = jnp.exp(energy - m)
    attn = e * pl.reciprocal(jnp.sum(e, axis=-1, keepdims=True), approx=True)

    if return_attn:
        attn_ref[...] = attn.astype(attn_ref.dtype)
    # TODO(synk): training-mode dropout on the attention matrix is not implemented (eval mode).
    x_ref[...] = jnp.dot(attn.astype(v.dtype), v,
                         preferred_element_type=jnp.float32).astype(x_ref.dtype)


def self_attention(query, key, value, wq, wk, wv, mask=None, *,
                   causal=False, return_attention=True):
    """Pallas equivalent of SelfAttentionLayer.forward (eval mode).

    query: [Sq, H]; key/value: [Skv, H]; weights: [H, H] (nn.Linear [out, in] layout).
    mask: optional (broadcastable to [Sq, Skv]); positions with mask == 0 get -1e10.
    causal=True generates a lower-triangular mask in-kernel (no mask DMA).
    Returns (x [Sq, H], attention [Sq, Skv]) — attention is None if return_attention=False.
    """
    sq, h = query.shape
    skv, hk = key.shape
    assert hk == h and value.shape == (skv, h)
    assert wq.shape == (h, h) and wk.shape == (h, h) and wv.shape == (h, h)

    shared_kv = key is value
    has_mask = mask is not None
    out_dtype = query.dtype
    itemsize = int(jnp.dtype(out_dtype).itemsize)

    # Lane/sublane-friendly padding: H and Skv to multiples of 128 lanes (lane-dense
    # outputs, full MXU contraction), Sq to a multiple of the 128-row tile.
    hp = _ceil_to(h, _LANE)
    skv_p = _ceil_to(skv, _LANE)
    sq_p = _ceil_to(sq, _LANE)
    tq = _row_tile(sq_p)
    grid_q = sq_p // tq

    q_p = _pad2d(query, sq_p, hp)
    kx_p = _pad2d(key, skv_p, hp)
    vx_p = kx_p if shared_kv else _pad2d(value, skv_p, hp)
    wq_p = _pad2d(wq, hp, hp)
    wk_p = _pad2d(wk, hp, hp)
    wv_p = _pad2d(wv, hp, hp)

    if has_mask:
        mask = jnp.broadcast_to(mask, (sq, skv)).astype(jnp.int8)  # int8: 4x less HBM traffic
        mask_p = _pad2d(mask, sq_p, skv_p)

    vmem_limit = _vmem_limit_bytes()

    # Single query tile: fuse K/V projections into the attention kernel (one launch,
    # no HBM roundtrip).  Multi-tile: project K/V once in a fused two-output kernel.
    project_kv = grid_q == 1
    if not project_kv:
        k_proj, v_proj = _project_kv(kx_p, vx_p, wk_p, wv_p, shared=shared_kv,
                                     out_dtype=out_dtype, vmem_limit=vmem_limit)

    in_specs = [pl.BlockSpec((tq, hp), lambda i: (i, 0)),   # query row tile
                _const_spec((hp, hp))]                      # Wq (fetched once)
    inputs = [q_p, wq_p]
    if project_kv:
        if shared_kv:
            in_specs += [_const_spec((skv_p, hp)), _const_spec((hp, hp)),
                         _const_spec((hp, hp))]
            inputs += [kx_p, wk_p, wv_p]
        else:
            in_specs += [_const_spec((skv_p, hp)), _const_spec((hp, hp)),
                         _const_spec((skv_p, hp)), _const_spec((hp, hp))]
            inputs += [kx_p, wk_p, vx_p, wv_p]
    else:
        in_specs += [_const_spec((skv_p, hp)), _const_spec((skv_p, hp))]
        inputs += [k_proj, v_proj]
    if has_mask:
        in_specs.append(pl.BlockSpec((tq, skv_p), lambda i: (i, 0)))   # int8 mask row strip
        inputs.append(mask_p)

    out_shape = [jax.ShapeDtypeStruct((sq_p, hp), out_dtype)]
    out_specs = [pl.BlockSpec((tq, hp), lambda i: (i, 0))]
    if return_attention:
        out_shape.append(jax.ShapeDtypeStruct((sq_p, skv_p), out_dtype))
        out_specs.append(pl.BlockSpec((tq, skv_p), lambda i: (i, 0)))

    kernel = functools.partial(
        _attention_kernel,
        inv_scale=1.0 / math.sqrt(h),
        skv_valid=skv,
        causal=causal,
        has_mask=has_mask,
        project_kv=project_kv,
        shared_kv=shared_kv,
        return_attn=return_attention,
    )

    flops = 2 * sq_p * hp * hp + 4 * sq_p * skv_p * hp
    if project_kv:
        flops += 4 * skv_p * hp * hp
    bytes_accessed = (2 * sq_p * hp + 3 * hp * hp + 2 * skv_p * hp) * itemsize
    if has_mask:
        bytes_accessed += sq_p * skv_p
    if return_attention:
        bytes_accessed += sq_p * skv_p * itemsize

    outs = pl.pallas_call(
        kernel,
        out_shape=tuple(out_shape),
        grid=(grid_q,),
        in_specs=in_specs,
        out_specs=tuple(out_specs),
        compiler_params=pltpu.CompilerParams(
            dimension_semantics=("parallel",),    # megacore splits q tiles (v7x)
            vmem_limit_bytes=vmem_limit,
        ),
        cost_estimate=pl.CostEstimate(
            flops=flops, transcendentals=sq_p * skv_p, bytes_accessed=bytes_accessed),
    )(*inputs)

    x = outs[0][:sq, :h]
    attn = outs[1][:sq, :skv] if return_attention else None
    return x, attn


# -----------------------------------------------------------------------------
# Pure-JAX reference (mirrors the PyTorch module).
# -----------------------------------------------------------------------------
def _reference(query, key, value, wq, wk, wv, mask=None):
    h = query.shape[1]
    q = query @ wq.T
    k = key @ wk.T
    v = value @ wv.T
    energy = (q @ k.T) / jnp.sqrt(jnp.float32(h))
    if mask is not None:
        energy = jnp.where(mask == 0, -1e10, energy)
    attn = jax.nn.softmax(energy, axis=-1)
    return attn @ v, attn


if __name__ == "__main__":
    SEQ, HIDDEN = 8, 32

    key0 = jax.random.PRNGKey(0)
    k_x, k_wq, k_wk, k_wv, k_q2, k_k2, k_v2 = jax.random.split(key0, 7)

    x_in = jax.random.normal(k_x, (SEQ, HIDDEN), dtype=jnp.float32)

    # nn.Linear default init: U(-1/sqrt(in_features), 1/sqrt(in_features))
    bound = 1.0 / (HIDDEN ** 0.5)
    wq = jax.random.uniform(k_wq, (HIDDEN, HIDDEN), minval=-bound, maxval=bound, dtype=jnp.float32)
    wk = jax.random.uniform(k_wk, (HIDDEN, HIDDEN), minval=-bound, maxval=bound, dtype=jnp.float32)
    wv = jax.random.uniform(k_wv, (HIDDEN, HIDDEN), minval=-bound, maxval=bound, dtype=jnp.float32)

    causal_mask = jnp.tril(jnp.ones((SEQ, SEQ), dtype=jnp.int32))

    # 1) Fully fused path (single q tile), self-attention (query is key is value), explicit mask.
    x, attn = self_attention(x_in, x_in, x_in, wq, wk, wv, causal_mask)
    jax.block_until_ready((x, attn))
    x_ref, attn_ref = _reference(x_in, x_in, x_in, wq, wk, wv, causal_mask)
    assert jnp.allclose(x, x_ref, atol=2e-2, rtol=2e-2), "f32 fused output mismatch"
    assert jnp.allclose(attn, attn_ref, atol=2e-2, rtol=2e-2), "f32 fused attention mismatch"

    # 2) In-kernel causal mask (no mask DMA) matches the explicit-mask reference.
    x_c, attn_c = self_attention(x_in, x_in, x_in, wq, wk, wv, mask=None, causal=True)
    jax.block_until_ready((x_c, attn_c))
    assert jnp.allclose(x_c, x_ref, atol=2e-2, rtol=2e-2), "causal output mismatch"
    assert jnp.allclose(attn_c, attn_ref, atol=2e-2, rtol=2e-2), "causal attention mismatch"

    # 3) Multi-tile path (separate fused K/V-projection kernel), distinct q/k/v.
    SEQ2 = 160   # pads to 256 rows -> two 128-row query tiles
    q2 = jax.random.normal(k_q2, (SEQ2, HIDDEN), dtype=jnp.float32)
    k2 = jax.random.normal(k_k2, (SEQ2, HIDDEN), dtype=jnp.float32)
    v2 = jax.random.normal(k_v2, (SEQ2, HIDDEN), dtype=jnp.float32)
    mask2 = jnp.tril(jnp.ones((SEQ2, SEQ2), dtype=jnp.int32))
    x2, attn2 = self_attention(q2, k2, v2, wq, wk, wv, mask2)
    jax.block_until_ready((x2, attn2))
    x2_ref, attn2_ref = _reference(q2, k2, v2, wq, wk, wv, mask2)
    assert jnp.allclose(x2, x2_ref, atol=2e-2, rtol=2e-2), "multi-tile output mismatch"
    assert jnp.allclose(attn2, attn2_ref, atol=2e-2, rtol=2e-2), "multi-tile attention mismatch"

    # 3b) x-only variant (skips the [Sq, Skv] attention-matrix HBM store).
    x2b, attn_none = self_attention(q2, k2, v2, wq, wk, wv, mask2, return_attention=False)
    jax.block_until_ready(x2b)
    assert attn_none is None
    assert jnp.allclose(x2b, x2_ref, atol=2e-2, rtol=2e-2), "x-only output mismatch"

    # 3c) Multi-tile self-attention (shared key/value -> single HBM read in the KV-proj kernel).
    x2s, attn2s = self_attention(q2, q2, q2, wq, wk, wv, mask2)
    jax.block_until_ready((x2s, attn2s))
    x2s_ref, attn2s_ref = _reference(q2, q2, q2, wq, wk, wv, mask2)
    assert jnp.allclose(x2s, x2s_ref, atol=2e-2, rtol=2e-2), "shared multi-tile output mismatch"
    assert jnp.allclose(attn2s, attn2s_ref, atol=2e-2, rtol=2e-2), "shared multi-tile attention mismatch"

    # 4) bf16 run (bf16 MXU operands, f32 accumulation) — loose check vs the f32 reference.
    bf = jnp.bfloat16
    x16, attn16 = self_attention(x_in.astype(bf), x_in.astype(bf), x_in.astype(bf),
                                 wq.astype(bf), wk.astype(bf), wv.astype(bf), causal_mask)
    jax.block_until_ready((x16, attn16))
    assert jnp.allclose(x16.astype(jnp.float32), x_ref, atol=1e-1, rtol=1e-1), "bf16 output mismatch"

    print("KERNEL_OK")
</pallas_src>

<mosaic_0001>
module attributes {stable_mosaic.version = 11 : i64} {
  func.func @_attention_kernel(%arg0: i32, %arg1: memref<128x128xf32, #tpu.memory_space<vmem>>, %arg2: memref<128x128xf32, #tpu.memory_space<vmem>>, %arg3: memref<128x128xf32, #tpu.memory_space<vmem>>, %arg4: memref<128x128xf32, #tpu.memory_space<vmem>>, %arg5: memref<128x128xf32, #tpu.memory_space<vmem>>, %arg6: memref<128x128xi8, #tpu.memory_space<vmem>>, %arg7: memref<128x128xf32, #tpu.memory_space<vmem>>, %arg8: memref<128x128xf32, #tpu.memory_space<vmem>>) attributes {dimension_semantics = [#tpu.dimension_semantics<parallel>], iteration_bounds = array<i64: 1>, scalar_prefetch = 0 : i64, scratch_operands = 0 : i64, tpu.core_type = #tpu.core_type<tc>, window_params = [{transform_indices = @transform_0, window_bounds = array<i64: 128, 128>}, {pipeline_mode = #tpu.pipeline_mode<synchronous>, transform_indices = @transform_1, window_bounds = array<i64: 128, 128>}, {pipeline_mode = #tpu.pipeline_mode<synchronous>, transform_indices = @transform_2, window_bounds = array<i64: 128, 128>}, {pipeline_mode = #tpu.pipeline_mode<synchronous>, transform_indices = @transform_3, window_bounds = array<i64: 128, 128>}, {pipeline_mode = #tpu.pipeline_mode<synchronous>, transform_indices = @transform_4, window_bounds = array<i64: 128, 128>}, {transform_indices = @transform_5, window_bounds = array<i64: 128, 128>}, {transform_indices = @transform_6, window_bounds = array<i64: 128, 128>}, {transform_indices = @transform_7, window_bounds = array<i64: 128, 128>}]} {
    %c0 = arith.constant 0 : index
    %c0_0 = arith.constant 0 : index
    %0 = vector.load %arg1[%c0, %c0_0] : memref<128x128xf32, #tpu.memory_space<vmem>>, vector<128x128xf32>
    %c0_1 = arith.constant 0 : index
    %c0_2 = arith.constant 0 : index
    %1 = vector.load %arg2[%c0_1, %c0_2] : memref<128x128xf32, #tpu.memory_space<vmem>>, vector<128x128xf32>
    %cst = arith.constant dense<0.000000e+00> : vector<128x128xf32>
    %2 = tpu.matmul %0, %1, %cst {dimension_numbers = #tpu.dot_dimension_numbers<[1], [1], [0], [0], [0, 0, 1, 0], [], []>} : vector<128x128xf32>, vector<128x128xf32>, vector<128x128xf32> -> vector<128x128xf32>
    %cst_3 = arith.constant 0.176776692 : f32
    %3 = vector.broadcast %cst_3 : f32 to vector<128x128xf32>
    %4 = arith.mulf %2, %3 : vector<128x128xf32>
    %c0_4 = arith.constant 0 : index
    %c0_5 = arith.constant 0 : index
    %5 = vector.load %arg3[%c0_4, %c0_5] : memref<128x128xf32, #tpu.memory_space<vmem>>, vector<128x128xf32>
    %c0_6 = arith.constant 0 : index
    %c0_7 = arith.constant 0 : index
    %6 = vector.load %arg4[%c0_6, %c0_7] : memref<128x128xf32, #tpu.memory_space<vmem>>, vector<128x128xf32>
    %cst_8 = arith.constant dense<0.000000e+00> : vector<128x128xf32>
    %7 = tpu.matmul %5, %6, %cst_8 {dimension_numbers = #tpu.dot_dimension_numbers<[1], [1], [0], [0], [0, 0, 1, 0], [], []>} : vector<128x128xf32>, vector<128x128xf32>, vector<128x128xf32> -> vector<128x128xf32>
    %c0_9 = arith.constant 0 : index
    %c0_10 = arith.constant 0 : index
    %8 = vector.load %arg5[%c0_9, %c0_10] : memref<128x128xf32, #tpu.memory_space<vmem>>, vector<128x128xf32>
    %cst_11 = arith.constant dense<0.000000e+00> : vector<128x128xf32>
    %9 = tpu.matmul %5, %8, %cst_11 {dimension_numbers = #tpu.dot_dimension_numbers<[1], [1], [0], [0], [0, 0, 1, 0], [], []>} : vector<128x128xf32>, vector<128x128xf32>, vector<128x128xf32> -> vector<128x128xf32>
    %cst_12 = arith.constant dense<0.000000e+00> : vector<128x128xf32>
    %10 = tpu.matmul %4, %7, %cst_12 {dimension_numbers = #tpu.dot_dimension_numbers<[1], [1], [0], [0], [0, 0, 1, 0], [], []>} : vector<128x128xf32>, vector<128x128xf32>, vector<128x128xf32> -> vector<128x128xf32>
    %11 = tpu.iota {dimensions = array<i32: 1>} : vector<128x128xi32>
    %c0_13 = arith.constant 0 : index
    %c0_14 = arith.constant 0 : index
    %12 = vector.load %arg6[%c0_13, %c0_14] : memref<128x128xi8, #tpu.memory_space<vmem>>, vector<128x128xi8>
    %13 = arith.extsi %12 : vector<128x128xi8> to vector<128x128xi32>
    %c0_i32 = arith.constant 0 : i32
    %14 = vector.broadcast %c0_i32 : i32 to vector<128x128xi32>
    %15 = arith.cmpi ne, %13, %14 : vector<128x128xi32>
    %cst_15 = arith.constant -1.000000e+10 : f32
    %16 = vector.broadcast %cst_15 : f32 to vector<128x128xf32>
    %17 = arith.select %15, %10, %16 : vector<128x128xi1>, vector<128x128xf32>
    %c8_i32 = arith.constant 8 : i32
    %18 = vector.broadcast %c8_i32 : i32 to vector<128x128xi32>
    %19 = arith.cmpi slt, %11, %18 : vector<128x128xi32>
    %cst_16 = arith.constant 0xFF800000 : f32
    %20 = vector.broadcast %cst_16 : f32 to vector<128x128xf32>
    %21 = arith.select %19, %17, %20 : vector<128x128xi1>, vector<128x128xf32>
    %cst_17 = arith.constant dense<0xFF800000> : vector<128xf32>
    %22 = vector.multi_reduction <maximumf>, %21, %cst_17 [1] : vector<128x128xf32> to vector<128xf32>
    %23 = vector.shape_cast %22 : vector<128xf32> to vector<128x1xf32>
    %24 = vector.broadcast %23 : vector<128x1xf32> to vector<128x128xf32>
    %25 = arith.subf %21, %24 : vector<128x128xf32>
    %26 = math.exp %25 : vector<128x128xf32>
    %cst_18 = arith.constant dense<0.000000e+00> : vector<128xf32>
    %27 = vector.multi_reduction <add>, %26, %cst_18 [1] : vector<128x128xf32> to vector<128xf32>
    %28 = vector.shape_cast %27 : vector<128xf32> to vector<128x1xf32>
    %29 = tpu.reciprocal %28 {approx = true} : vector<128x1xf32> -> vector<128x1xf32>
    %30 = vector.broadcast %29 : vector<128x1xf32> to vector<128x128xf32>
    %31 = arith.mulf %26, %30 : vector<128x128xf32>
    %c0_19 = arith.constant 0 : index
    %c0_20 = arith.constant 0 : index
    %32 = vector.load %arg8[%c0_19, %c0_20] : memref<128x128xf32, #tpu.memory_space<vmem>>, vector<128x128xf32>
    tpu.vector_store %arg8[%c0_19, %c0_20], %31 {strides = array<i32>} : memref<128x128xf32, #tpu.memory_space<vmem>>, vector<128x128xf32>,
    %cst_21 = arith.constant dense<0.000000e+00> : vector<128x128xf32>
    %33 = tpu.matmul %31, %9, %cst_21 {dimension_numbers = #tpu.dot_dimension_numbers<[1], [0], [0], [1], [0, 0, 1, 1], [], []>} : vector<128x128xf32>, vector<128x128xf32>, vector<128x128xf32> -> vector<128x128xf32>
    %c0_22 = arith.constant 0 : index
    %c0_23 = arith.constant 0 : index
    %34 = vector.load %arg7[%c0_22, %c0_23] : memref<128x128xf32, #tpu.memory_space<vmem>>, vector<128x128xf32>
    tpu.vector_store %arg7[%c0_22, %c0_23], %33 {strides = array<i32>} : memref<128x128xf32, #tpu.memory_space<vmem>>, vector<128x128xf32>,
    return
  }
  func.func @transform_0(%arg0: i32) -> (i32, i32) {
    %c0_i32 = arith.constant 0 : i32
    %c0_i32_0 = arith.constant 0 : i32
    return %arg0, %c0_i32 : i32, i32
  }
  func.func @transform_1(%arg0: i32) -> (i32, i32) {
    %c0_i32 = arith.constant 0 : i32
    %c0_i32_0 = arith.constant 0 : i32
    %c0_i32_1 = arith.constant 0 : i32
    return %c0_i32, %c0_i32_0 : i32, i32
  }
  func.func @transform_2(%arg0: i32) -> (i32, i32) {
    %c0_i32 = arith.constant 0 : i32
    %c0_i32_0 = arith.constant 0 : i32
    %c0_i32_1 = arith.constant 0 : i32
    return %c0_i32, %c0_i32_0 : i32, i32
  }
  func.func @transform_3(%arg0: i32) -> (i32, i32) {
    %c0_i32 = arith.constant 0 : i32
    %c0_i32_0 = arith.constant 0 : i32
    %c0_i32_1 = arith.constant 0 : i32
    return %c0_i32, %c0_i32_0 : i32, i32
  }
  func.func @transform_4(%arg0: i32) -> (i32, i32) {
    %c0_i32 = arith.constant 0 : i32
    %c0_i32_0 = arith.constant 0 : i32
    %c0_i32_1 = arith.constant 0 : i32
    return %c0_i32, %c0_i32_0 : i32, i32
  }
  func.func @transform_5(%arg0: i32) -> (i32, i32) {
    %c0_i32 = arith.constant 0 : i32
    %c0_i32_0 = arith.constant 0 : i32
    return %arg0, %c0_i32 : i32, i32
  }
  func.func @transform_6(%arg0: i32) -> (i32, i32) {
    %c0_i32 = arith.constant 0 : i32
    %c0_i32_0 = arith.constant 0 : i32
    return %arg0, %c0_i32 : i32, i32
  }
  func.func @transform_7(%arg0: i32) -> (i32, i32) {
    %c0_i32 = arith.constant 0 : i32
    %c0_i32_0 = arith.constant 0 : i32
    return %arg0, %c0_i32 : i32, i32
  }
}

</mosaic_0001>

<llo_original>
// kernel: tpu_custom_call.1
$region0: #{tpu_custom_call.1}
  #allocation0 [shape = 'u32[]', space=smem, size = 0x4, offset = 0x4, fixed_abs, tag = 'smem constant byte address 0x4 - core index']
  #allocation1 [shape = 'u32[144,128]{1,0:T(1,128)}', space=vmem, size = 0x12000, scoped, tag = 'internal scratch']
  %s0 = inlined_call_operand.hbm [shape: f32[128,128], index: 0, kind: input, shape index: {}]
  %s1 = inlined_call_operand.hbm [shape: f32[128,128], index: 1, kind: input, shape index: {}]
  %s2 = inlined_call_operand.hbm [shape: f32[128,128], index: 2, kind: input, shape index: {}]
  %s3 = inlined_call_operand.hbm [shape: f32[128,128], index: 3, kind: input, shape index: {}]
  %s4 = inlined_call_operand.hbm [shape: f32[128,128], index: 4, kind: input, shape index: {}]
  %s5 = inlined_call_operand.hbm [shape: s8[128,128], index: 5, kind: input, shape index: {}]
  %s6 = inlined_call_operand.hbm [shape: f32[128,128], index: 6, kind: output, shape index: {0}]
  %s7 = inlined_call_operand.hbm [shape: f32[128,128], index: 7, kind: output, shape index: {1}]
  %8 = xla_tuple %s6, %s7
  %s9 = sld [smem:[#allocation0]]
  $region66: #{tpu_custom_call.1} parent=0
    _
  %s11 = ssub.s32 1, %s9
  %s12 = scalar_select 0, %s11, %s9
  $region1: #{tpu_custom_call.1} parent=0
    #allocation2 [shape = 'u8[65536]{0}', space=vmem, size = 0x10000, scoped, tag = 'input window, operand 0, single buffered']
    #allocation3 [shape = 's32[1]{0}', space=sflag, size = 0x4, scoped, tag = 'scoped memory for tpu_custom_call.1']
    #allocation4 [shape = 's32[1]{0}', space=sflag, size = 0x4, scoped, tag = 'scoped memory for tpu_custom_call.1']
    #allocation5 [shape = 'u8[65536]{0}', space=vmem, size = 0x10000, scoped, tag = 'input window, operand 1, single buffered']
    #allocation6 [shape = 's32[1]{0}', space=sflag, size = 0x4, scoped, tag = 'scoped memory for tpu_custom_call.1']
    #allocation7 [shape = 'u8[65536]{0}', space=vmem, size = 0x10000, scoped, tag = 'input window, operand 2, single buffered']
    #allocation8 [shape = 'u8[65536]{0}', space=vmem, size = 0x10000, scoped, tag = 'input window, operand 3, single buffered']
    #allocation9 [shape = 's32[1]{0}', space=sflag, size = 0x4, scoped, tag = 'scoped memory for tpu_custom_call.1']
    #allocation10 [shape = 'u8[65536]{0}', space=vmem, size = 0x10000, scoped, tag = 'input window, operand 4, single buffered']
    #allocation11 [shape = 'u8[16384]{0}', space=vmem, size = 0x4000, scoped, tag = 'input window, operand 5, single buffered']
    #allocation12 [shape = 's32[1]{0}', space=sflag, size = 0x4, scoped, tag = 'scoped memory for tpu_custom_call.1']
    #allocation13 [shape = 'u8[65536]{0}', space=vmem, size = 0x10000, scoped, tag = 'output window, operand 0, single buffered']
    #allocation14 [shape = 'u8[65536]{0}', space=vmem, size = 0x10000, scoped, tag = 'output window, operand 1, single buffered']
    #allocation15 [shape = 's32[1]{0}', space=sflag, size = 0x4, scoped, tag = 'scoped memory for tpu_custom_call.1']
    %13 = vsyncpa [#allocation3], 0
    %14 = vsyncpa [#allocation6], 0
    %15 = vsyncpa [#allocation9], 0
    %16 = vsyncpa [#allocation12], 0
    %17 = vsyncpa [#allocation4], 0
    %18 = vsyncpa [#allocation15], 0
    // Predicated region
    $region2: #{tpu_custom_call.1} parent=1 // pred_check
      _
    $region3: #{tpu_custom_call.1} parent=1 // pred_check_branch
      %20 = sbr.rel (0) target = $region5
    $region4: #{tpu_custom_call.1} parent=1 // pred_region
      %s22 = ssub.s32 2048, 2048
      %23 = vsyncadd [#allocation3], %s22
      %s24 = sshll.u32 [#allocation2], 4
      %s25 = int_to_ptr.vmem [resolvable:$true] %s24
      %30 = dma.hbm_to_vmem [thread:$0]  %s0, 2048, %s25, [#allocation3], 128, 128, 8
    $region5: #{tpu_custom_call.1} parent=1 // pred_fallthru
      _
    // Predicated region
    $region6: #{tpu_custom_call.1} parent=1 // pred_check
      _
    $region7: #{tpu_custom_call.1} parent=1 // pred_check_branch
      %32 = sbr.rel (0) target = $region9
    $region8: #{tpu_custom_call.1} parent=1 // pred_region
      %s34 = ssub.s32 2048, 2048
      %35 = vsyncadd [#allocation6], %s34
      %s36 = sshll.u32 [#allocation5], 4
      %s37 = int_to_ptr.vmem [resolvable:$true] %s36
      %42 = dma.hbm_to_vmem [thread:$0]  %s1, 2048, %s37, [#allocation6], 128, 128, 8
    $region9: #{tpu_custom_call.1} parent=1 // pred_fallthru
      _
    // Predicated region
    $region10: #{tpu_custom_call.1} parent=1 // pred_check
      _
    $region11: #{tpu_custom_call.1} parent=1 // pred_check_branch
      %44 = sbr.rel (0) target = $region13
    $region12: #{tpu_custom_call.1} parent=1 // pred_region
      %s46 = ssub.s32 2048, 2048
      %47 = vsyncadd [#allocation6], %s46
      %s48 = sshll.u32 [#allocation7], 4
      %s49 = int_to_ptr.vmem [resolvable:$true] %s48
      %54 = dma.hbm_to_vmem [thread:$0]  %s2, 2048, %s49, [#allocation6], 128, 128, 8
    $region13: #{tpu_custom_call.1} parent=1 // pred_fallthru
      _
    // Predicated region
    $region14: #{tpu_custom_call.1} parent=1 // pred_check
      _
    $region15: #{tpu_custom_call.1} parent=1 // pred_check_branch
      %56 = sbr.rel (0) target = $region17
    $region16: #{tpu_custom_call.1} parent=1 // pred_region
      %s58 = ssub.s32 2048, 2048
      %59 = vsyncadd [#allocation9], %s58
      %s60 = sshll.u32 [#allocation8], 4
      %s61 = int_to_ptr.vmem [resolvable:$true] %s60
      %66 = dma.hbm_to_vmem [thread:$0]  %s3, 2048, %s61, [#allocation9], 128, 128, 8
    $region17: #{tpu_custom_call.1} parent=1 // pred_fallthru
      _
    // Predicated region
    $region18: #{tpu_custom_call.1} parent=1 // pred_check
      _
    $region19: #{tpu_custom_call.1} parent=1 // pred_check_branch
      %68 = sbr.rel (0) target = $region21
    $region20: #{tpu_custom_call.1} parent=1 // pred_region
      %s70 = ssub.s32 2048, 2048
      %71 = vsyncadd [#allocation9], %s70
      %s72 = sshll.u32 [#allocation10], 4
      %s73 = int_to_ptr.vmem [resolvable:$true] %s72
      %78 = dma.hbm_to_vmem [thread:$0]  %s4, 2048, %s73, [#allocation9], 128, 128, 8
    $region21: #{tpu_custom_call.1} parent=1 // pred_fallthru
      _
    // Predicated region
    $region22: #{tpu_custom_call.1} parent=1 // pred_check
      _
    $region23: #{tpu_custom_call.1} parent=1 // pred_check_branch
      %80 = sbr.rel (0) target = $region25
    $region24: #{tpu_custom_call.1} parent=1 // pred_region
      %s82 = ssub.s32 512, 512
      %83 = vsyncadd [#allocation12], %s82
      %s84 = sshll.u32 [#allocation11], 4
      %s85 = int_to_ptr.vmem [resolvable:$true] %s84
      %90 = dma.hbm_to_vmem [thread:$0]  %s5, 512, %s85, [#allocation12], 128, 128, 8
    $region25: #{tpu_custom_call.1} parent=1 // pred_fallthru
      _
    // Predicated region
    $region26: #{tpu_custom_call.1} parent=1 // pred_check
      _
    $region27: #{tpu_custom_call.1} parent=1 // pred_check_branch
      %92 = sbr.rel (0) target = $region29
    $region28: #{tpu_custom_call.1} parent=1 // pred_region
      %93 = dma.done [#allocation3], 2048
    $region29: #{tpu_custom_call.1} parent=1 // pred_fallthru
      _
    // Predicated region
    $region30: #{tpu_custom_call.1} parent=1 // pred_check
      _
    $region31: #{tpu_custom_call.1} parent=1 // pred_check_branch
      %95 = sbr.rel (0) target = $region33
    $region32: #{tpu_custom_call.1} parent=1 // pred_region
      %96 = dma.done [#allocation6], 2048
    $region33: #{tpu_custom_call.1} parent=1 // pred_fallthru
      _
    // Predicated region
    $region34: #{tpu_custom_call.1} parent=1 // pred_check
      _
    $region35: #{tpu_custom_call.1} parent=1 // pred_check_branch
      %98 = sbr.rel (0) target = $region37
    $region36: #{tpu_custom_call.1} parent=1 // pred_region
      %99 = dma.done [#allocation6], 2048
    $region37: #{tpu_custom_call.1} parent=1 // pred_fallthru
      _
    // Predicated region
    $region38: #{tpu_custom_call.1} parent=1 // pred_check
      _
    $region39: #{tpu_custom_call.1} parent=1 // pred_check_branch
      %101 = sbr.rel (0) target = $region41
    $region40: #{tpu_custom_call.1} parent=1 // pred_region
      %102 = dma.done [#allocation9], 2048
    $region41: #{tpu_custom_call.1} parent=1 // pred_fallthru
      _
    // Predicated region
    $region42: #{tpu_custom_call.1} parent=1 // pred_check
      _
    $region43: #{tpu_custom_call.1} parent=1 // pred_check_branch
      %104 = sbr.rel (0) target = $region45
    $region44: #{tpu_custom_call.1} parent=1 // pred_region
      %105 = dma.done [#allocation9], 2048
    $region45: #{tpu_custom_call.1} parent=1 // pred_fallthru
      _
    // Predicated region
    $region46: #{tpu_custom_call.1} parent=1 // pred_check
      _
    $region47: #{tpu_custom_call.1} parent=1 // pred_check_branch
      %107 = sbr.rel (0) target = $region49
    $region48: #{tpu_custom_call.1} parent=1 // pred_region
      %108 = dma.done [#allocation12], 512
    $region49: #{tpu_custom_call.1} parent=1 // pred_fallthru
      _
    %v109 = vld [vmem:[#allocation2] sm:$0xff]
    %v110 = vld [vmem:[#allocation2 + $0x8] sm:$0xff]
    %v111 = vld [vmem:[#allocation2 + $0x10] sm:$0xff]
    %v112 = vld [vmem:[#allocation2 + $0x18] sm:$0xff]
    %v113 = vld [vmem:[#allocation2 + $0x20] sm:$0xff]
    %v114 = vld [vmem:[#allocation2 + $0x28] sm:$0xff]
    %v115 = vld [vmem:[#allocation2 + $0x30] sm:$0xff]
    %v116 = vld [vmem:[#allocation2 + $0x38] sm:$0xff]
    %v117 = vld [vmem:[#allocation2 + $0x40] sm:$0xff]
    %v118 = vld [vmem:[#allocation2 + $0x48] sm:$0xff]
    %v119 = vld [vmem:[#allocation2 + $0x50] sm:$0xff]
    %v120 = vld [vmem:[#allocation2 + $0x58] sm:$0xff]
    %v121 = vld [vmem:[#allocation2 + $0x60] sm:$0xff]
    %v122 = vld [vmem:[#allocation2 + $0x68] sm:$0xff]
    %v123 = vld [vmem:[#allocation2 + $0x70] sm:$0xff]
    %v124 = vld [vmem:[#allocation2 + $0x78] sm:$0xff]
    %v125 = vld [vmem:[#allocation5] sm:$0xff]
    %v126 = vld [vmem:[#allocation5 + $0x8] sm:$0xff]
    %v127 = vld [vmem:[#allocation5 + $0x10] sm:$0xff]
    %v128 = vld [vmem:[#allocation5 + $0x18] sm:$0xff]
    %v129 = vld [vmem:[#allocation5 + $0x20] sm:$0xff]
    %v130 = vld [vmem:[#allocation5 + $0x28] sm:$0xff]
    %v131 = vld [vmem:[#allocation5 + $0x30] sm:$0xff]
    %v132 = vld [vmem:[#allocation5 + $0x38] sm:$0xff]
    %v133 = vld [vmem:[#allocation5 + $0x40] sm:$0xff]
    %v134 = vld [vmem:[#allocation5 + $0x48] sm:$0xff]
    %v135 = vld [vmem:[#allocation5 + $0x50] sm:$0xff]
    %v136 = vld [vmem:[#allocation5 + $0x58] sm:$0xff]
    %v137 = vld [vmem:[#allocation5 + $0x60] sm:$0xff]
    %v138 = vld [vmem:[#allocation5 + $0x68] sm:$0xff]
    %v139 = vld [vmem:[#allocation5 + $0x70] sm:$0xff]
    %v140 = vld [vmem:[#allocation5 + $0x78] sm:$0xff]
    %141 = vmatprep.subr.mxu0 0.0
    %142 = vmatpush1.xpose.msra.mxu0 %v125
    %143 = vmatprep.subr.mxu0 0.0
    %144 = vmatpush1.xpose.msra.mxu0 %v126
    %145 = vmatprep.subr.mxu0 0.0
    %146 = vmatpush1.xpose.msra.mxu0 %v127
    %147 = vmatprep.subr.mxu0 0.0
    %148 = vmatpush1.xpose.msra.mxu0 %v128
    %149 = vmatprep.subr.mxu0 0.0
    %150 = vmatpush1.xpose.msra.mxu0 %v129
    %151 = vmatprep.subr.mxu0 0.0
    %152 = vmatpush1.xpose.msra.mxu0 %v130
    %153 = vmatprep.subr.mxu0 0.0
    %154 = vmatpush1.xpose.msra.mxu0 %v131
    %155 = vmatprep.subr.mxu0 0.0
    %156 = vmatpush1.xpose.msra.mxu0 %v132
    %157 = vmatprep.subr.mxu0 0.0
    %158 = vmatpush1.xpose.msra.mxu0 %v133
    %159 = vmatprep.subr.mxu0 0.0
    %160 = vmatpush1.xpose.msra.mxu0 %v134
    %161 = vmatprep.subr.mxu0 0.0
    %162 = vmatpush1.xpose.msra.mxu0 %v135
    %163 = vmatprep.subr.mxu0 0.0
    %164 = vmatpush1.xpose.msra.mxu0 %v136
    %165 = vmatprep.subr.mxu0 0.0
    %166 = vmatpush1.xpose.msra.mxu0 %v137
    %167 = vmatprep.subr.mxu0 0.0
    %168 = vmatpush1.xpose.msra.mxu0 %v138
    %169 = vmatprep.subr.mxu0 0.0
    %170 = vmatpush1.xpose.msra.mxu0 %v139
    %171 = vmatprep.subr.mxu0 0.0
    %172 = vmatpush1.xpose.msra.mxu0 %v140
    %173 = vmatprep.subr.mxu0 0.0
    %174 = vmatpush1.xpose.msra.mxu0 0.0
    %175 = vmatprep.subr.mxu0 0.0
    %176 = vmatpush1.xpose.msra.mxu0 0.0
    %177 = vmatprep.subr.mxu0 0.0
    %178 = vmatpush1.xpose.msra.mxu0 0.0
    %179 = vmatprep.subr.mxu0 0.0
    %180 = vmatpush1.xpose.msra.mxu0 0.0
    %181 = vmatprep.subr.mxu0 0.0
    %182 = vmatpush1.xpose.msra.mxu0 0.0
    %183 = vmatprep.subr.mxu0 0.0
    %184 = vmatpush1.xpose.msra.mxu0 0.0
    %185 = vmatprep.subr.mxu0 0.0
    %186 = vmatpush1.xpose.msra.mxu0 0.0
    %187 = vmatprep.subr.mxu0 0.0
    %188 = vmatpush1.xpose.msra.mxu0 0.0
    %189 = vmatprep.subr.mxu0 0.0
    %190 = vmatpush1.xpose.msra.mxu0 0.0
    %191 = vmatprep.subr.mxu0 0.0
    %192 = vmatpush1.xpose.msra.mxu0 0.0
    %193 = vmatprep.subr.mxu0 0.0
    %194 = vmatpush1.xpose.msra.mxu0 0.0
    %195 = vmatprep.subr.mxu0 0.0
    %196 = vmatpush1.xpose.msra.mxu0 0.0
    %197 = vmatprep.subr.mxu0 0.0
    %198 = vmatpush1.xpose.msra.mxu0 0.0
    %199 = vmatprep.subr.mxu0 0.0
    %200 = vmatpush1.xpose.msra.mxu0 0.0
    %201 = vmatprep.subr.mxu0 0.0
    %202 = vmatpush1.xpose.msra.mxu0 0.0
    %203 = vmatprep.subr.mxu0 0.0
    %204 = vmatpush1.xpose.msra.mxu0 0.0
    %205 = vmatprep.mubr.f32.mxu0 0.0
    %206 = vmatmul.mubr.f32.gmra.mrb[0].mxu0 %v109
    %v207 = vpop.f32.mrb[0].mxu0
    %v208 = vadd.f32 0.0, %v207
    %v209 = vpop.f32.mrb[0].mxu0
    %210 = vmatprep.mubr.f32.mxu0 0.0
    %211 = vmatmul.mubr.f32.gmra.mrb[0].mxu0 %v110
    %v212 = vpop.f32.mrb[0].mxu0
    %v213 = vadd.f32 0.0, %v212
    %v214 = vpop.f32.mrb[0].mxu0
    %215 = vmatprep.mubr.f32.mxu0 0.0
    %216 = vmatmul.mubr.f32.gmra.mrb[0].mxu0 %v111
    %v217 = vpop.f32.mrb[0].mxu0
    %v218 = vadd.f32 0.0, %v217
    %v219 = vpop.f32.mrb[0].mxu0
    %220 = vmatprep.mubr.f32.mxu0 0.0
    %221 = vmatmul.mubr.f32.gmra.mrb[0].mxu0 %v112
    %v222 = vpop.f32.mrb[0].mxu0
    %v223 = vadd.f32 0.0, %v222
    %v224 = vpop.f32.mrb[0].mxu0
    %225 = vmatprep.mubr.f32.mxu0 0.0
    %226 = vmatmul.mubr.f32.gmra.mrb[0].mxu0 %v113
    %v227 = vpop.f32.mrb[0].mxu0
    %v228 = vadd.f32 0.0, %v227
    %v229 = vpop.f32.mrb[0].mxu0
    %230 = vmatprep.mubr.f32.mxu0 0.0
    %231 = vmatmul.mubr.f32.gmra.mrb[0].mxu0 %v114
    %v232 = vpop.f32.mrb[0].mxu0
    %v233 = vadd.f32 0.0, %v232
    %v234 = vpop.f32.mrb[0].mxu0
    %235 = vmatprep.mubr.f32.mxu0 0.0
    %236 = vmatmul.mubr.f32.gmra.mrb[0].mxu0 %v115
    %v237 = vpop.f32.mrb[0].mxu0
    %v238 = vadd.f32 0.0, %v237
    %v239 = vpop.f32.mrb[0].mxu0
    %240 = vmatprep.mubr.f32.mxu0 0.0
    %241 = vmatmul.mubr.f32.gmra.mrb[0].mxu0 %v116
    %v242 = vpop.f32.mrb[0].mxu0
    %v243 = vadd.f32 0.0, %v242
    %v244 = vpop.f32.mrb[0].mxu0
    %245 = vmatprep.mubr.f32.mxu0 0.0
    %246 = vmatmul.mubr.f32.gmra.mrb[0].mxu0 %v117
    %v247 = vpop.f32.mrb[0].mxu0
    %v248 = vadd.f32 0.0, %v247
    %v249 = vpop.f32.mrb[0].mxu0
    %250 = vmatprep.mubr.f32.mxu0 0.0
    %251 = vmatmul.mubr.f32.gmra.mrb[0].mxu0 %v118
    %v252 = vpop.f32.mrb[0].mxu0
    %v253 = vadd.f32 0.0, %v252
    %v254 = vpop.f32.mrb[0].mxu0
    %255 = vmatprep.mubr.f32.mxu0 0.0
    %256 = vmatmul.mubr.f32.gmra.mrb[0].mxu0 %v119
    %v257 = vpop.f32.mrb[0].mxu0
    %v258 = vadd.f32 0.0, %v257
    %v259 = vpop.f32.mrb[0].mxu0
    %260 = vmatprep.mubr.f32.mxu0 0.0
    %261 = vmatmul.mubr.f32.gmra.mrb[0].mxu0 %v120
    %v262 = vpop.f32.mrb[0].mxu0
    %v263 = vadd.f32 0.0, %v262
    %v264 = vpop.f32.mrb[0].mxu0
    %265 = vmatprep.mubr.f32.mxu0 0.0
    %266 = vmatmul.mubr.f32.gmra.mrb[0].mxu0 %v121
    %v267 = vpop.f32.mrb[0].mxu0
    %v268 = vadd.f32 0.0, %v267
    %v269 = vpop.f32.mrb[0].mxu0
    %270 = vmatprep.mubr.f32.mxu0 0.0
    %271 = vmatmul.mubr.f32.gmra.mrb[0].mxu0 %v122
    %v272 = vpop.f32.mrb[0].mxu0
    %v273 = vadd.f32 0.0, %v272
    %v274 = vpop.f32.mrb[0].mxu0
    %275 = vmatprep.mubr.f32.mxu0 0.0
    %276 = vmatmul.mubr.f32.gmra.mrb[0].mxu0 %v123
    %v277 = vpop.f32.mrb[0].mxu0
    %v278 = vadd.f32 0.0, %v277
    %v279 = vpop.f32.mrb[0].mxu0
    %280 = vmatprep.mubr.f32.mxu0 0.0
    %281 = vmatmul.mubr.f32.gmra.mrb[0].mxu0 %v124
    %v282 = vpop.f32.mrb[0].mxu0
    %v283 = vadd.f32 0.0, %v282
    %v284 = vpop.f32.mrb[0].mxu0
    %285 = vdwg.mxu0
    %v286 = vmul.f32 %v208, 0.17677669
    %v287 = vmul.f32 %v213, 0.17677669
    %v288 = vmul.f32 %v218, 0.17677669
    %v289 = vmul.f32 %v223, 0.17677669
    %v290 = vmul.f32 %v228, 0.17677669
    %v291 = vmul.f32 %v233, 0.17677669
    %v292 = vmul.f32 %v238, 0.17677669
    %v293 = vmul.f32 %v243, 0.17677669
    %v294 = vmul.f32 %v248, 0.17677669
    %v295 = vmul.f32 %v253, 0.17677669
    %v296 = vmul.f32 %v258, 0.17677669
    %v297 = vmul.f32 %v263, 0.17677669
    %v298 = vmul.f32 %v268, 0.17677669
    %v299 = vmul.f32 %v273, 0.17677669
    %v300 = vmul.f32 %v278, 0.17677669
    %v301 = vmul.f32 %v283, 0.17677669
    %v302 = vld [vmem:[#allocation7] sm:$0xff]
    %v303 = vld [vmem:[#allocation7 + $0x8] sm:$0xff]
    %v304 = vld [vmem:[#allocation7 + $0x10] sm:$0xff]
    %v305 = vld [vmem:[#allocation7 + $0x18] sm:$0xff]
    %v306 = vld [vmem:[#allocation7 + $0x20] sm:$0xff]
    %v307 = vld [vmem:[#allocation7 + $0x28] sm:$0xff]
    %v308 = vld [vmem:[#allocation7 + $0x30] sm:$0xff]
    %v309 = vld [vmem:[#allocation7 + $0x38] sm:$0xff]
    %v310 = vld [vmem:[#allocation7 + $0x40] sm:$0xff]
    %v311 = vld [vmem:[#allocation7 + $0x48] sm:$0xff]
    %v312 = vld [vmem:[#allocation7 + $0x50] sm:$0xff]
    %v313 = vld [vmem:[#allocation7 + $0x58] sm:$0xff]
    %v314 = vld [vmem:[#allocation7 + $0x60] sm:$0xff]
    %v315 = vld [vmem:[#allocation7 + $0x68] sm:$0xff]
    %v316 = vld [vmem:[#allocation7 + $0x70] sm:$0xff]
    %v317 = vld [vmem:[#allocation7 + $0x78] sm:$0xff]
    %v318 = vld [vmem:[#allocation8] sm:$0xff]
    %v319 = vld [vmem:[#allocation8 + $0x8] sm:$0xff]
    %v320 = vld [vmem:[#allocation8 + $0x10] sm:$0xff]
    %v321 = vld [vmem:[#allocation8 + $0x18] sm:$0xff]
    %v322 = vld [vmem:[#allocation8 + $0x20] sm:$0xff]
    %v323 = vld [vmem:[#allocation8 + $0x28] sm:$0xff]
    %v324 = vld [vmem:[#allocation8 + $0x30] sm:$0xff]
    %v325 = vld [vmem:[#allocation8 + $0x38] sm:$0xff]
    %v326 = vld [vmem:[#allocation8 + $0x40] sm:$0xff]
    %v327 = vld [vmem:[#allocation8 + $0x48] sm:$0xff]
    %v328 = vld [vmem:[#allocation8 + $0x50] sm:$0xff]
    %v329 = vld [vmem:[#allocation8 + $0x58] sm:$0xff]
    %v330 = vld [vmem:[#allocation8 + $0x60] sm:$0xff]
    %v331 = vld [vmem:[#allocation8 + $0x68] sm:$0xff]
    %v332 = vld [vmem:[#allocation8 + $0x70] sm:$0xff]
    %v333 = vld [vmem:[#allocation8 + $0x78] sm:$0xff]
    %334 = vmatprep.subr.mxu0 0.0
    %335 = vmatpush1.xpose.msra.mxu0 %v318
    %336 = vmatprep.subr.mxu0 0.0
    %337 = vmatpush1.xpose.msra.mxu0 %v319
    %338 = vmatprep.subr.mxu0 0.0
    %339 = vmatpush1.xpose.msra.mxu0 %v320
    %340 = vmatprep.subr.mxu0 0.0
    %341 = vmatpush1.xpose.msra.mxu0 %v321
    %342 = vmatprep.subr.mxu0 0.0
    %343 = vmatpush1.xpose.msra.mxu0 %v322
    %344 = vmatprep.subr.mxu0 0.0
    %345 = vmatpush1.xpose.msra.mxu0 %v323
    %346 = vmatprep.subr.mxu0 0.0
    %347 = vmatpush1.xpose.msra.mxu0 %v324
    %348 = vmatprep.subr.mxu0 0.0
    %349 = vmatpush1.xpose.msra.mxu0 %v325
    %350 = vmatprep.subr.mxu0 0.0
    %351 = vmatpush1.xpose.msra.mxu0 %v326
    %352 = vmatprep.subr.mxu0 0.0
    %353 = vmatpush1.xpose.msra.mxu0 %v327
    %354 = vmatprep.subr.mxu0 0.0
    %355 = vmatpush1.xpose.msra.mxu0 %v328
    %356 = vmatprep.subr.mxu0 0.0
    %357 = vmatpush1.xpose.msra.mxu0 %v329
    %358 = vmatprep.subr.mxu0 0.0
    %359 = vmatpush1.xpose.msra.mxu0 %v330
    %360 = vmatprep.subr.mxu0 0.0
    %361 = vmatpush1.xpose.msra.mxu0 %v331
    %362 = vmatprep.subr.mxu0 0.0
    %363 = vmatpush1.xpose.msra.mxu0 %v332
    %364 = vmatprep.subr.mxu0 0.0
    %365 = vmatpush1.xpose.msra.mxu0 %v333
    %366 = vmatprep.subr.mxu0 0.0
    %367 = vmatpush1.xpose.msra.mxu0 0.0
    %368 = vmatprep.subr.mxu0 0.0
    %369 = vmatpush1.xpose.msra.mxu0 0.0
    %370 = vmatprep.subr.mxu0 0.0
    %371 = vmatpush1.xpose.msra.mxu0 0.0
    %372 = vmatprep.subr.mxu0 0.0
    %373 = vmatpush1.xpose.msra.mxu0 0.0
    %374 = vmatprep.subr.mxu0 0.0
    %375 = vmatpush1.xpose.msra.mxu0 0.0
    %376 = vmatprep.subr.mxu0 0.0
    %377 = vmatpush1.xpose.msra.mxu0 0.0
    %378 = vmatprep.subr.mxu0 0.0
    %379 = vmatpush1.xpose.msra.mxu0 0.0
    %380 = vmatprep.subr.mxu0 0.0
    %381 = vmatpush1.xpose.msra.mxu0 0.0
    %382 = vmatprep.subr.mxu0 0.0
    %383 = vmatpush1.xpose.msra.mxu0 0.0
    %384 = vmatprep.subr.mxu0 0.0
    %385 = vmatpush1.xpose.msra.mxu0 0.0
    %386 = vmatprep.subr.mxu0 0.0
    %387 = vmatpush1.xpose.msra.mxu0 0.0
    %388 = vmatprep.subr.mxu0 0.0
    %389 = vmatpush1.xpose.msra.mxu0 0.0
    %390 = vmatprep.subr.mxu0 0.0
    %391 = vmatpush1.xpose.msra.mxu0 0.0
    %392 = vmatprep.subr.mxu0 0.0
    %393 = vmatpush1.xpose.msra.mxu0 0.0
    %394 = vmatprep.subr.mxu0 0.0
    %395 = vmatpush1.xpose.msra.mxu0 0.0
    %396 = vmatprep.subr.mxu0 0.0
    %397 = vmatpush1.xpose.msra.mxu0 0.0
    %398 = vmatprep.mubr.f32.mxu0 0.0
    %399 = vmatmul.mubr.f32.gmra.mrb[0].mxu0 %v302
    %v400 = vpop.f32.mrb[0].mxu0
    %v401 = vadd.f32 0.0, %v400
    %v402 = vpop.f32.mrb[0].mxu0
    %403 = vmatprep.mubr.f32.mxu0 0.0
    %404 = vmatmul.mubr.f32.gmra.mrb[0].mxu0 %v303
    %v405 = vpop.f32.mrb[0].mxu0
    %v406 = vadd.f32 0.0, %v405
    %v407 = vpop.f32.mrb[0].mxu0
    %408 = vmatprep.mubr.f32.mxu0 0.0
    %409 = vmatmul.mubr.f32.gmra.mrb[0].mxu0 %v304
    %v410 = vpop.f32.mrb[0].mxu0
    %v411 = vadd.f32 0.0, %v410
    %v412 = vpop.f32.mrb[0].mxu0
    %413 = vmatprep.mubr.f32.mxu0 0.0
    %414 = vmatmul.mubr.f32.gmra.mrb[0].mxu0 %v305
    %v415 = vpop.f32.mrb[0].mxu0
    %v416 = vadd.f32 0.0, %v415
    %v417 = vpop.f32.mrb[0].mxu0
    %418 = vmatprep.mubr.f32.mxu0 0.0
    %419 = vmatmul.mubr.f32.gmra.mrb[0].mxu0 %v306
    %v420 = vpop.f32.mrb[0].mxu0
    %v421 = vadd.f32 0.0, %v420
    %v422 = vpop.f32.mrb[0].mxu0
    %423 = vmatprep.mubr.f32.mxu0 0.0
    %424 = vmatmul.mubr.f32.gmra.mrb[0].mxu0 %v307
    %v425 = vpop.f32.mrb[0].mxu0
    %v426 = vadd.f32 0.0, %v425
    %v427 = vpop.f32.mrb[0].mxu0
    %428 = vmatprep.mubr.f32.mxu0 0.0
    %429 = vmatmul.mubr.f32.gmra.mrb[0].mxu0 %v308
    %v430 = vpop.f32.mrb[0].mxu0
    %v431 = vadd.f32 0.0, %v430
    %v432 = vpop.f32.mrb[0].mxu0
    %433 = vmatprep.mubr.f32.mxu0 0.0
    %434 = vmatmul.mubr.f32.gmra.mrb[0].mxu0 %v309
    %v435 = vpop.f32.mrb[0].mxu0
    %v436 = vadd.f32 0.0, %v435
    %v437 = vpop.f32.mrb[0].mxu0
    %438 = vmatprep.mubr.f32.mxu0 0.0
    %439 = vmatmul.mubr.f32.gmra.mrb[0].mxu0 %v310
    %v440 = vpop.f32.mrb[0].mxu0
    %v441 = vadd.f32 0.0, %v440
    %v442 = vpop.f32.mrb[0].mxu0
    %443 = vmatprep.mubr.f32.mxu0 0.0
    %444 = vmatmul.mubr.f32.gmra.mrb[0].mxu0 %v311
    %v445 = vpop.f32.mrb[0].mxu0
    %v446 = vadd.f32 0.0, %v445
    %v447 = vpop.f32.mrb[0].mxu0
    %448 = vmatprep.mubr.f32.mxu0 0.0
    %449 = vmatmul.mubr.f32.gmra.mrb[0].mxu0 %v312
    %v450 = vpop.f32.mrb[0].mxu0
    %v451 = vadd.f32 0.0, %v450
    %v452 = vpop.f32.mrb[0].mxu0
    %453 = vmatprep.mubr.f32.mxu0 0.0
    %454 = vmatmul.mubr.f32.gmra.mrb[0].mxu0 %v313
    %v455 = vpop.f32.mrb[0].mxu0
    %v456 = vadd.f32 0.0, %v455
    %v457 = vpop.f32.mrb[0].mxu0
    %458 = vmatprep.mubr.f32.mxu0 0.0
    %459 = vmatmul.mubr.f32.gmra.mrb[0].mxu0 %v314
    %v460 = vpop.f32.mrb[0].mxu0
    %v461 = vadd.f32 0.0, %v460
    %v462 = vpop.f32.mrb[0].mxu0
    %463 = vmatprep.mubr.f32.mxu0 0.0
    %464 = vmatmul.mubr.f32.gmra.mrb[0].mxu0 %v315
    %v465 = vpop.f32.mrb[0].mxu0
    %v466 = vadd.f32 0.0, %v465
    %v467 = vpop.f32.mrb[0].mxu0
    %468 = vmatprep.mubr.f32.mxu0 0.0
    %469 = vmatmul.mubr.f32.gmra.mrb[0].mxu0 %v316
    %v470 = vpop.f32.mrb[0].mxu0
    %v471 = vadd.f32 0.0, %v470
    %v472 = vpop.f32.mrb[0].mxu0
    %473 = vmatprep.mubr.f32.mxu0 0.0
    %474 = vmatmul.mubr.f32.gmra.mrb[0].mxu0 %v317
    %v475 = vpop.f32.mrb[0].mxu0
    %v476 = vadd.f32 0.0, %v475
    %v477 = vpop.f32.mrb[0].mxu0
    %478 = vdwg.mxu0
    %v479 = vld [vmem:[#allocation10] sm:$0xff]
    %v480 = vld [vmem:[#allocation10 + $0x8] sm:$0xff]
    %v481 = vld [vmem:[#allocation10 + $0x10] sm:$0xff]
    %v482 = vld [vmem:[#allocation10 + $0x18] sm:$0xff]
    %v483 = vld [vmem:[#allocation10 + $0x20] sm:$0xff]
    %v484 = vld [vmem:[#allocation10 + $0x28] sm:$0xff]
    %v485 = vld [vmem:[#allocation10 + $0x30] sm:$0xff]
    %v486 = vld [vmem:[#allocation10 + $0x38] sm:$0xff]
    %v487 = vld [vmem:[#allocation10 + $0x40] sm:$0xff]
    %v488 = vld [vmem:[#allocation10 + $0x48] sm:$0xff]
    %v489 = vld [vmem:[#allocation10 + $0x50] sm:$0xff]
    %v490 = vld [vmem:[#allocation10 + $0x58] sm:$0xff]
    %v491 = vld [vmem:[#allocation10 + $0x60] sm:$0xff]
    %v492 = vld [vmem:[#allocation10 + $0x68] sm:$0xff]
    %v493 = vld [vmem:[#allocation10 + $0x70] sm:$0xff]
    %v494 = vld [vmem:[#allocation10 + $0x78] sm:$0xff]
    %495 = vmatprep.subr.mxu0 0.0
    %496 = vmatpush1.xpose.msra.mxu0 %v479
    %497 = vmatprep.subr.mxu0 0.0
    %498 = vmatpush1.xpose.msra.mxu0 %v480
    %499 = vmatprep.subr.mxu0 0.0
    %500 = vmatpush1.xpose.msra.mxu0 %v481
    %501 = vmatprep.subr.mxu0 0.0
    %502 = vmatpush1.xpose.msra.mxu0 %v482
    %503 = vmatprep.subr.mxu0 0.0
    %504 = vmatpush1.xpose.msra.mxu0 %v483
    %505 = vmatprep.subr.mxu0 0.0
    %506 = vmatpush1.xpose.msra.mxu0 %v484
    %507 = vmatprep.subr.mxu0 0.0
    %508 = vmatpush1.xpose.msra.mxu0 %v485
    %509 = vmatprep.subr.mxu0 0.0
    %510 = vmatpush1.xpose.msra.mxu0 %v486
    %511 = vmatprep.subr.mxu0 0.0
    %512 = vmatpush1.xpose.msra.mxu0 %v487
    %513 = vmatprep.subr.mxu0 0.0
    %514 = vmatpush1.xpose.msra.mxu0 %v488
    %515 = vmatprep.subr.mxu0 0.0
    %516 = vmatpush1.xpose.msra.mxu0 %v489
    %517 = vmatprep.subr.mxu0 0.0
    %518 = vmatpush1.xpose.msra.mxu0 %v490
    %519 = vmatprep.subr.mxu0 0.0
    %520 = vmatpush1.xpose.msra.mxu0 %v491
    %521 = vmatprep.subr.mxu0 0.0
    %522 = vmatpush1.xpose.msra.mxu0 %v492
    %523 = vmatprep.subr.mxu0 0.0
    %524 = vmatpush1.xpose.msra.mxu0 %v493
    %525 = vmatprep.subr.mxu0 0.0
    %526 = vmatpush1.xpose.msra.mxu0 %v494
    %527 = vmatprep.subr.mxu0 0.0
    %528 = vmatpush1.xpose.msra.mxu0 0.0
    %529 = vmatprep.subr.mxu0 0.0
    %530 = vmatpush1.xpose.msra.mxu0 0.0
    %531 = vmatprep.subr.mxu0 0.0
    %532 = vmatpush1.xpose.msra.mxu0 0.0
    %533 = vmatprep.subr.mxu0 0.0
    %534 = vmatpush1.xpose.msra.mxu0 0.0
    %535 = vmatprep.subr.mxu0 0.0
    %536 = vmatpush1.xpose.msra.mxu0 0.0
    %537 = vmatprep.subr.mxu0 0.0
    %538 = vmatpush1.xpose.msra.mxu0 0.0
    %539 = vmatprep.subr.mxu0 0.0
    %540 = vmatpush1.xpose.msra.mxu0 0.0
    %541 = vmatprep.subr.mxu0 0.0
    %542 = vmatpush1.xpose.msra.mxu0 0.0
    %543 = vmatprep.subr.mxu0 0.0
    %544 = vmatpush1.xpose.msra.mxu0 0.0
    %545 = vmatprep.subr.mxu0 0.0
    %546 = vmatpush1.xpose.msra.mxu0 0.0
    %547 = vmatprep.subr.mxu0 0.0
    %548 = vmatpush1.xpose.msra.mxu0 0.0
    %549 = vmatprep.subr.mxu0 0.0
    %550 = vmatpush1.xpose.msra.mxu0 0.0
    %551 = vmatprep.subr.mxu0 0.0
    %552 = vmatpush1.xpose.msra.mxu0 0.0
    %553 = vmatprep.subr.mxu0 0.0
    %554 = vmatpush1.xpose.msra.mxu0 0.0
    %555 = vmatprep.subr.mxu0 0.0
    %556 = vmatpush1.xpose.msra.mxu0 0.0
    %557 = vmatprep.subr.mxu0 0.0
    %558 = vmatpush1.xpose.msra.mxu0 0.0
    %559 = vmatprep.mubr.f32.mxu0 0.0
    %560 = vmatmul.mubr.f32.gmra.mrb[0].mxu0 %v302
    %v561 = vpop.f32.mrb[0].mxu0
    %v562 = vadd.f32 0.0, %v561
    %v563 = vpop.f32.mrb[0].mxu0
    %564 = vmatprep.mubr.f32.mxu0 0.0
    %565 = vmatmul.mubr.f32.gmra.mrb[0].mxu0 %v303
    %v566 = vpop.f32.mrb[0].mxu0
    %v567 = vadd.f32 0.0, %v566
    %v568 = vpop.f32.mrb[0].mxu0
    %569 = vmatprep.mubr.f32.mxu0 0.0
    %570 = vmatmul.mubr.f32.gmra.mrb[0].mxu0 %v304
    %v571 = vpop.f32.mrb[0].mxu0
    %v572 = vadd.f32 0.0, %v571
    %v573 = vpop.f32.mrb[0].mxu0
    %574 = vmatprep.mubr.f32.mxu0 0.0
    %575 = vmatmul.mubr.f32.gmra.mrb[0].mxu0 %v305
    %v576 = vpop.f32.mrb[0].mxu0
    %v577 = vadd.f32 0.0, %v576
    %v578 = vpop.f32.mrb[0].mxu0
    %579 = vmatprep.mubr.f32.mxu0 0.0
    %580 = vmatmul.mubr.f32.gmra.mrb[0].mxu0 %v306
    %v581 = vpop.f32.mrb[0].mxu0
    %v582 = vadd.f32 0.0, %v581
    %v583 = vpop.f32.mrb[0].mxu0
    %584 = vmatprep.mubr.f32.mxu0 0.0
    %585 = vmatmul.mubr.f32.gmra.mrb[0].mxu0 %v307
    %v586 = vpop.f32.mrb[0].mxu0
    %v587 = vadd.f32 0.0, %v586
    %v588 = vpop.f32.mrb[0].mxu0
    %589 = vmatprep.mubr.f32.mxu0 0.0
    %590 = vmatmul.mubr.f32.gmra.mrb[0].mxu0 %v308
    %v591 = vpop.f32.mrb[0].mxu0
    %v592 = vadd.f32 0.0, %v591
    %v593 = vpop.f32.mrb[0].mxu0
    %594 = vmatprep.mubr.f32.mxu0 0.0
    %595 = vmatmul.mubr.f32.gmra.mrb[0].mxu0 %v309
    %v596 = vpop.f32.mrb[0].mxu0
    %v597 = vadd.f32 0.0, %v596
    %v598 = vpop.f32.mrb[0].mxu0
    %599 = vmatprep.mubr.f32.mxu0 0.0
    %600 = vmatmul.mubr.f32.gmra.mrb[0].mxu0 %v310
    %v601 = vpop.f32.mrb[0].mxu0
    %v602 = vadd.f32 0.0, %v601
    %v603 = vpop.f32.mrb[0].mxu0
    %604 = vmatprep.mubr.f32.mxu0 0.0
    %605 = vmatmul.mubr.f32.gmra.mrb[0].mxu0 %v311
    %v606 = vpop.f32.mrb[0].mxu0
    %v607 = vadd.f32 0.0, %v606
    %v608 = vpop.f32.mrb[0].mxu0
    %609 = vmatprep.mubr.f32.mxu0 0.0
    %610 = vmatmul.mubr.f32.gmra.mrb[0].mxu0 %v312
    %v611 = vpop.f32.mrb[0].mxu0
    %v612 = vadd.f32 0.0, %v611
    %v613 = vpop.f32.mrb[0].mxu0
    %614 = vmatprep.mubr.f32.mxu0 0.0
    %615 = vmatmul.mubr.f32.gmra.mrb[0].mxu0 %v313
    %v616 = vpop.f32.mrb[0].mxu0
    %v617 = vadd.f32 0.0, %v616
    %v618 = vpop.f32.mrb[0].mxu0
    %619 = vmatprep.mubr.f32.mxu0 0.0
    %620 = vmatmul.mubr.f32.gmra.mrb[0].mxu0 %v314
    %v621 = vpop.f32.mrb[0].mxu0
    %v622 = vadd.f32 0.0, %v621
    %v623 = vpop.f32.mrb[0].mxu0
    %624 = vmatprep.mubr.f32.mxu0 0.0
    %625 = vmatmul.mubr.f32.gmra.mrb[0].mxu0 %v315
    %v626 = vpop.f32.mrb[0].mxu0
    %v627 = vadd.f32 0.0, %v626
    %v628 = vpop.f32.mrb[0].mxu0
    %629 = vmatprep.mubr.f32.mxu0 0.0
    %630 = vmatmul.mubr.f32.gmra.mrb[0].mxu0 %v316
    %v631 = vpop.f32.mrb[0].mxu0
    %v632 = vadd.f32 0.0, %v631
    %v633 = vpop.f32.mrb[0].mxu0
    %634 = vmatprep.mubr.f32.mxu0 0.0
    %635 = vmatmul.mubr.f32.gmra.mrb[0].mxu0 %v317
    %v636 = vpop.f32.mrb[0].mxu0
    %v637 = vadd.f32 0.0, %v636
    %v638 = vpop.f32.mrb[0].mxu0
    %639 = vdwg.mxu0
    %640 = vmatprep.subr.mxu0 0.0
    %641 = vmatpush1.xpose.msra.mxu0 %v401
    %642 = vmatprep.subr.mxu0 0.0
    %643 = vmatpush1.xpose.msra.mxu0 %v406
    %644 = vmatprep.subr.mxu0 0.0
    %645 = vmatpush1.xpose.msra.mxu0 %v411
    %646 = vmatprep.subr.mxu0 0.0
    %647 = vmatpush1.xpose.msra.mxu0 %v416
    %648 = vmatprep.subr.mxu0 0.0
    %649 = vmatpush1.xpose.msra.mxu0 %v421
    %650 = vmatprep.subr.mxu0 0.0
    %651 = vmatpush1.xpose.msra.mxu0 %v426
    %652 = vmatprep.subr.mxu0 0.0
    %653 = vmatpush1.xpose.msra.mxu0 %v431
    %654 = vmatprep.subr.mxu0 0.0
    %655 = vmatpush1.xpose.msra.mxu0 %v436
    %656 = vmatprep.subr.mxu0 0.0
    %657 = vmatpush1.xpose.msra.mxu0 %v441
    %658 = vmatprep.subr.mxu0 0.0
    %659 = vmatpush1.xpose.msra.mxu0 %v446
    %660 = vmatprep.subr.mxu0 0.0
    %661 = vmatpush1.xpose.msra.mxu0 %v451
    %662 = vmatprep.subr.mxu0 0.0
    %663 = vmatpush1.xpose.msra.mxu0 %v456
    %664 = vmatprep.subr.mxu0 0.0
    %665 = vmatpush1.xpose.msra.mxu0 %v461
    %666 = vmatprep.subr.mxu0 0.0
    %667 = vmatpush1.xpose.msra.mxu0 %v466
    %668 = vmatprep.subr.mxu0 0.0
    %669 = vmatpush1.xpose.msra.mxu0 %v471
    %670 = vmatprep.subr.mxu0 0.0
    %671 = vmatpush1.xpose.msra.mxu0 %v476
    %672 = vmatprep.subr.mxu0 0.0
    %673 = vmatpush1.xpose.msra.mxu0 0.0
    %674 = vmatprep.subr.mxu0 0.0
    %675 = vmatpush1.xpose.msra.mxu0 0.0
    %676 = vmatprep.subr.mxu0 0.0
    %677 = vmatpush1.xpose.msra.mxu0 0.0
    %678 = vmatprep.subr.mxu0 0.0
    %679 = vmatpush1.xpose.msra.mxu0 0.0
    %680 = vmatprep.subr.mxu0 0.0
    %681 = vmatpush1.xpose.msra.mxu0 0.0
    %682 = vmatprep.subr.mxu0 0.0
    %683 = vmatpush1.xpose.msra.mxu0 0.0
    %684 = vmatprep.subr.mxu0 0.0
    %685 = vmatpush1.xpose.msra.mxu0 0.0
    %686 = vmatprep.subr.mxu0 0.0
    %687 = vmatpush1.xpose.msra.mxu0 0.0
    %688 = vmatprep.subr.mxu0 0.0
    %689 = vmatpush1.xpose.msra.mxu0 0.0
    %690 = vmatprep.subr.mxu0 0.0
    %691 = vmatpush1.xpose.msra.mxu0 0.0
    %692 = vmatprep.subr.mxu0 0.0
    %693 = vmatpush1.xpose.msra.mxu0 0.0
    %694 = vmatprep.subr.mxu0 0.0
    %695 = vmatpush1.xpose.msra.mxu0 0.0
    %696 = vmatprep.subr.mxu0 0.0
    %697 = vmatpush1.xpose.msra.mxu0 0.0
    %698 = vmatprep.subr.mxu0 0.0
    %699 = vmatpush1.xpose.msra.mxu0 0.0
    %700 = vmatprep.subr.mxu0 0.0
    %701 = vmatpush1.xpose.msra.mxu0 0.0
    %702 = vmatprep.subr.mxu0 0.0
    %703 = vmatpush1.xpose.msra.mxu0 0.0
    %704 = vmatprep.mubr.f32.mxu0 0.0
    %705 = vmatmul.mubr.f32.gmra.mrb[0].mxu0 %v286
    %v706 = vpop.f32.mrb[0].mxu0
    %v707 = vadd.f32 0.0, %v706
    %v708 = vpop.f32.mrb[0].mxu0
    %709 = vmatprep.mubr.f32.mxu0 0.0
    %710 = vmatmul.mubr.f32.gmra.mrb[0].mxu0 %v287
    %v711 = vpop.f32.mrb[0].mxu0
    %v712 = vadd.f32 0.0, %v711
    %v713 = vpop.f32.mrb[0].mxu0
    %714 = vmatprep.mubr.f32.mxu0 0.0
    %715 = vmatmul.mubr.f32.gmra.mrb[0].mxu0 %v288
    %v716 = vpop.f32.mrb[0].mxu0
    %v717 = vadd.f32 0.0, %v716
    %v718 = vpop.f32.mrb[0].mxu0
    %719 = vmatprep.mubr.f32.mxu0 0.0
    %720 = vmatmul.mubr.f32.gmra.mrb[0].mxu0 %v289
    %v721 = vpop.f32.mrb[0].mxu0
    %v722 = vadd.f32 0.0, %v721
    %v723 = vpop.f32.mrb[0].mxu0
    %724 = vmatprep.mubr.f32.mxu0 0.0
    %725 = vmatmul.mubr.f32.gmra.mrb[0].mxu0 %v290
    %v726 = vpop.f32.mrb[0].mxu0
    %v727 = vadd.f32 0.0, %v726
    %v728 = vpop.f32.mrb[0].mxu0
    %729 = vmatprep.mubr.f32.mxu0 0.0
    %730 = vmatmul.mubr.f32.gmra.mrb[0].mxu0 %v291
    %v731 = vpop.f32.mrb[0].mxu0
    %v732 = vadd.f32 0.0, %v731
    %v733 = vpop.f32.mrb[0].mxu0
    %734 = vmatprep.mubr.f32.mxu0 0.0
    %735 = vmatmul.mubr.f32.gmra.mrb[0].mxu0 %v292
    %v736 = vpop.f32.mrb[0].mxu0
    %v737 = vadd.f32 0.0, %v736
    %v738 = vpop.f32.mrb[0].mxu0
    %739 = vmatprep.mubr.f32.mxu0 0.0
    %740 = vmatmul.mubr.f32.gmra.mrb[0].mxu0 %v293
    %v741 = vpop.f32.mrb[0].mxu0
    %v742 = vadd.f32 0.0, %v741
    %v743 = vpop.f32.mrb[0].mxu0
    %744 = vmatprep.mubr.f32.mxu0 0.0
    %745 = vmatmul.mubr.f32.gmra.mrb[0].mxu0 %v294
    %v746 = vpop.f32.mrb[0].mxu0
    %v747 = vadd.f32 0.0, %v746
    %v748 = vpop.f32.mrb[0].mxu0
    %749 = vmatprep.mubr.f32.mxu0 0.0
    %750 = vmatmul.mubr.f32.gmra.mrb[0].mxu0 %v295
    %v751 = vpop.f32.mrb[0].mxu0
    %v752 = vadd.f32 0.0, %v751
    %v753 = vpop.f32.mrb[0].mxu0
    %754 = vmatprep.mubr.f32.mxu0 0.0
    %755 = vmatmul.mubr.f32.gmra.mrb[0].mxu0 %v296
    %v756 = vpop.f32.mrb[0].mxu0
    %v757 = vadd.f32 0.0, %v756
    %v758 = vpop.f32.mrb[0].mxu0
    %759 = vmatprep.mubr.f32.mxu0 0.0
    %760 = vmatmul.mubr.f32.gmra.mrb[0].mxu0 %v297
    %v761 = vpop.f32.mrb[0].mxu0
    %v762 = vadd.f32 0.0, %v761
    %v763 = vpop.f32.mrb[0].mxu0
    %764 = vmatprep.mubr.f32.mxu0 0.0
    %765 = vmatmul.mubr.f32.gmra.mrb[0].mxu0 %v298
    %v766 = vpop.f32.mrb[0].mxu0
    %v767 = vadd.f32 0.0, %v766
    %v768 = vpop.f32.mrb[0].mxu0
    %769 = vmatprep.mubr.f32.mxu0 0.0
    %770 = vmatmul.mubr.f32.gmra.mrb[0].mxu0 %v299
    %v771 = vpop.f32.mrb[0].mxu0
    %v772 = vadd.f32 0.0, %v771
    %v773 = vpop.f32.mrb[0].mxu0
    %774 = vmatprep.mubr.f32.mxu0 0.0
    %775 = vmatmul.mubr.f32.gmra.mrb[0].mxu0 %v300
    %v776 = vpop.f32.mrb[0].mxu0
    %v777 = vadd.f32 0.0, %v776
    %v778 = vpop.f32.mrb[0].mxu0
    %779 = vmatprep.mubr.f32.mxu0 0.0
    %780 = vmatmul.mubr.f32.gmra.mrb[0].mxu0 %v301
    %v781 = vpop.f32.mrb[0].mxu0
    %v782 = vadd.f32 0.0, %v781
    %v783 = vpop.f32.mrb[0].mxu0
    %784 = vdwg.mxu0
    %v785 = vlaneseq
    %v786 = vand.u32 %v785, 127
    %v787 = vld [vmem:[#allocation11] sm:$0xff]
    %v788 = vld [vmem:[#allocation11 + $0x8] sm:$0xff]
    %v789 = vld [vmem:[#allocation11 + $0x10] sm:$0xff]
    %v790 = vld [vmem:[#allocation11 + $0x18] sm:$0xff]
    %v791 = vunpack.c.0.s8 %v787
    %v792 = vunpack.c.1.s8 %v787
    %v793 = vunpack.c.2.s8 %v787
    %v794 = vunpack.c.3.s8 %v787
    %v795 = vunpack.c.0.s8 %v788
    %v796 = vunpack.c.1.s8 %v788
    %v797 = vunpack.c.2.s8 %v788
    %v798 = vunpack.c.3.s8 %v788
    %v799 = vunpack.c.0.s8 %v789
    %v800 = vunpack.c.1.s8 %v789
    %v801 = vunpack.c.2.s8 %v789
    %v802 = vunpack.c.3.s8 %v789
    %v803 = vunpack.c.0.s8 %v790
    %v804 = vunpack.c.1.s8 %v790
    %v805 = vunpack.c.2.s8 %v790
    %v806 = vunpack.c.3.s8 %v790
    %vm807 = vcmp.ne.s32.totalorder %v791, 0
    %vm808 = vcmp.ne.s32.totalorder %v792, 0
    %vm809 = vcmp.ne.s32.totalorder %v793, 0
    %vm810 = vcmp.ne.s32.totalorder %v794, 0
    %vm811 = vcmp.ne.s32.totalorder %v795, 0
    %vm812 = vcmp.ne.s32.totalorder %v796, 0
    %vm813 = vcmp.ne.s32.totalorder %v797, 0
    %vm814 = vcmp.ne.s32.totalorder %v798, 0
    %vm815 = vcmp.ne.s32.totalorder %v799, 0
    %vm816 = vcmp.ne.s32.totalorder %v800, 0
    %vm817 = vcmp.ne.s32.totalorder %v801, 0
    %vm818 = vcmp.ne.s32.totalorder %v802, 0
    %vm819 = vcmp.ne.s32.totalorder %v803, 0
    %vm820 = vcmp.ne.s32.totalorder %v804, 0
    %vm821 = vcmp.ne.s32.totalorder %v805, 0
    %vm822 = vcmp.ne.s32.totalorder %v806, 0
    %v823 = vsel %vm807, %v707, -1e+10
    %v824 = vsel %vm808, %v712, -1e+10
    %v825 = vsel %vm809, %v717, -1e+10
    %v826 = vsel %vm810, %v722, -1e+10
    %v827 = vsel %vm811, %v727, -1e+10
    %v828 = vsel %vm812, %v732, -1e+10
    %v829 = vsel %vm813, %v737, -1e+10
    %v830 = vsel %vm814, %v742, -1e+10
    %v831 = vsel %vm815, %v747, -1e+10
    %v832 = vsel %vm816, %v752, -1e+10
    %v833 = vsel %vm817, %v757, -1e+10
    %v834 = vsel %vm818, %v762, -1e+10
    %v835 = vsel %vm819, %v767, -1e+10
    %v836 = vsel %vm820, %v772, -1e+10
    %v837 = vsel %vm821, %v777, -1e+10
    %v838 = vsel %vm822, %v782, -1e+10
    %vm839 = vcmp.lt.s32.totalorder %v786, 8
    %v840 = vsel %vm839, %v823, -inf
    %v841 = vsel %vm839, %v824, -inf
    %v842 = vsel %vm839, %v825, -inf
    %v843 = vsel %vm839, %v826, -inf
    %v844 = vsel %vm839, %v827, -inf
    %v845 = vsel %vm839, %v828, -inf
    %v846 = vsel %vm839, %v829, -inf
    %v847 = vsel %vm839, %v830, -inf
    %v848 = vsel %vm839, %v831, -inf
    %v849 = vsel %vm839, %v832, -inf
    %v850 = vsel %vm839, %v833, -inf
    %v851 = vsel %vm839, %v834, -inf
    %v852 = vsel %vm839, %v835, -inf
    %v853 = vsel %vm839, %v836, -inf
    %v854 = vsel %vm839, %v837, -inf
    %v855 = vsel %vm839, %v838, -inf
    %856 = vmax.xlane.f32.xlu0 %v840
    %v857 = vpop.xlane.xlu0 %856
    %858 = vmax.xlane.f32.xlu0 %v841
    %v859 = vpop.xlane.xlu0 %858
    %860 = vmax.xlane.f32.xlu0 %v842
    %v861 = vpop.xlane.xlu0 %860
    %862 = vmax.xlane.f32.xlu0 %v843
    %v863 = vpop.xlane.xlu0 %862
    %864 = vmax.xlane.f32.xlu0 %v844
    %v865 = vpop.xlane.xlu0 %864
    %866 = vmax.xlane.f32.xlu0 %v845
    %v867 = vpop.xlane.xlu0 %866
    %868 = vmax.xlane.f32.xlu0 %v846
    %v869 = vpop.xlane.xlu0 %868
    %870 = vmax.xlane.f32.xlu0 %v847
    %v871 = vpop.xlane.xlu0 %870
    %872 = vmax.xlane.f32.xlu0 %v848
    %v873 = vpop.xlane.xlu0 %872
    %874 = vmax.xlane.f32.xlu0 %v849
    %v875 = vpop.xlane.xlu0 %874
    %876 = vmax.xlane.f32.xlu0 %v850
    %v877 = vpop.xlane.xlu0 %876
    %878 = vmax.xlane.f32.xlu0 %v851
    %v879 = vpop.xlane.xlu0 %878
    %880 = vmax.xlane.f32.xlu0 %v852
    %v881 = vpop.xlane.xlu0 %880
    %882 = vmax.xlane.f32.xlu0 %v853
    %v883 = vpop.xlane.xlu0 %882
    %884 = vmax.xlane.f32.xlu0 %v854
    %v885 = vpop.xlane.xlu0 %884
    %886 = vmax.xlane.f32.xlu0 %v855
    %v887 = vpop.xlane.xlu0 %886
    %v888 = vsub.f32 %v840, %v857
    %v889 = vsub.f32 %v841, %v859
    %v890 = vsub.f32 %v842, %v861
    %v891 = vsub.f32 %v843, %v863
    %v892 = vsub.f32 %v844, %v865
    %v893 = vsub.f32 %v845, %v867
    %v894 = vsub.f32 %v846, %v869
    %v895 = vsub.f32 %v847, %v871
    %v896 = vsub.f32 %v848, %v873
    %v897 = vsub.f32 %v849, %v875
    %v898 = vsub.f32 %v850, %v877
    %v899 = vsub.f32 %v851, %v879
    %v900 = vsub.f32 %v852, %v881
    %v901 = vsub.f32 %v853, %v883
    %v902 = vsub.f32 %v854, %v885
    %v903 = vsub.f32 %v855, %v887
    %v904 = vmul.f32 %v888, 1.442695
    %v905 = vpow.pop %v904
    %v906 = vmul.f32 %v889, 1.442695
    %v907 = vpow.pop %v906
    %v908 = vmul.f32 %v890, 1.442695
    %v909 = vpow.pop %v908
    %v910 = vmul.f32 %v891, 1.442695
    %v911 = vpow.pop %v910
    %v912 = vmul.f32 %v892, 1.442695
    %v913 = vpow.pop %v912
    %v914 = vmul.f32 %v893, 1.442695
    %v915 = vpow.pop %v914
    %v916 = vmul.f32 %v894, 1.442695
    %v917 = vpow.pop %v916
    %v918 = vmul.f32 %v895, 1.442695
    %v919 = vpow.pop %v918
    %v920 = vmul.f32 %v896, 1.442695
    %v921 = vpow.pop %v920
    %v922 = vmul.f32 %v897, 1.442695
    %v923 = vpow.pop %v922
    %v924 = vmul.f32 %v898, 1.442695
    %v925 = vpow.pop %v924
    %v926 = vmul.f32 %v899, 1.442695
    %v927 = vpow.pop %v926
    %v928 = vmul.f32 %v900, 1.442695
    %v929 = vpow.pop %v928
    %v930 = vmul.f32 %v901, 1.442695
    %v931 = vpow.pop %v930
    %v932 = vmul.f32 %v902, 1.442695
    %v933 = vpow.pop %v932
    %v934 = vmul.f32 %v903, 1.442695
    %v935 = vpow.pop %v934
    %936 = vadd.xlane.f32.xlu0 %v905
    %v937 = vpop.xlane.xlu0 %936
    %938 = vadd.xlane.f32.xlu0 %v907
    %v939 = vpop.xlane.xlu0 %938
    %940 = vadd.xlane.f32.xlu0 %v909
    %v941 = vpop.xlane.xlu0 %940
    %942 = vadd.xlane.f32.xlu0 %v911
    %v943 = vpop.xlane.xlu0 %942
    %944 = vadd.xlane.f32.xlu0 %v913
    %v945 = vpop.xlane.xlu0 %944
    %946 = vadd.xlane.f32.xlu0 %v915
    %v947 = vpop.xlane.xlu0 %946
    %948 = vadd.xlane.f32.xlu0 %v917
    %v949 = vpop.xlane.xlu0 %948
    %950 = vadd.xlane.f32.xlu0 %v919
    %v951 = vpop.xlane.xlu0 %950
    %952 = vadd.xlane.f32.xlu0 %v921
    %v953 = vpop.xlane.xlu0 %952
    %954 = vadd.xlane.f32.xlu0 %v923
    %v955 = vpop.xlane.xlu0 %954
    %956 = vadd.xlane.f32.xlu0 %v925
    %v957 = vpop.xlane.xlu0 %956
    %958 = vadd.xlane.f32.xlu0 %v927
    %v959 = vpop.xlane.xlu0 %958
    %960 = vadd.xlane.f32.xlu0 %v929
    %v961 = vpop.xlane.xlu0 %960
    %962 = vadd.xlane.f32.xlu0 %v931
    %v963 = vpop.xlane.xlu0 %962
    %964 = vadd.xlane.f32.xlu0 %v933
    %v965 = vpop.xlane.xlu0 %964
    %966 = vadd.xlane.f32.xlu0 %v935
    %v967 = vpop.xlane.xlu0 %966
    %v968 = vrcp.pop %v937
    %v969 = vrcp.pop %v939
    %v970 = vrcp.pop %v941
    %v971 = vrcp.pop %v943
    %v972 = vrcp.pop %v945
    %v973 = vrcp.pop %v947
    %v974 = vrcp.pop %v949
    %v975 = vrcp.pop %v951
    %v976 = vrcp.pop %v953
    %v977 = vrcp.pop %v955
    %v978 = vrcp.pop %v957
    %v979 = vrcp.pop %v959
    %v980 = vrcp.pop %v961
    %v981 = vrcp.pop %v963
    %v982 = vrcp.pop %v965
    %v983 = vrcp.pop %v967
    %v984 = vmul.f32 %v905, %v968
    %v985 = vmul.f32 %v907, %v969
    %v986 = vmul.f32 %v909, %v970
    %v987 = vmul.f32 %v911, %v971
    %v988 = vmul.f32 %v913, %v972
    %v989 = vmul.f32 %v915, %v973
    %v990 = vmul.f32 %v917, %v974
    %v991 = vmul.f32 %v919, %v975
    %v992 = vmul.f32 %v921, %v976
    %v993 = vmul.f32 %v923, %v977
    %v994 = vmul.f32 %v925, %v978
    %v995 = vmul.f32 %v927, %v979
    %v996 = vmul.f32 %v929, %v980
    %v997 = vmul.f32 %v931, %v981
    %v998 = vmul.f32 %v933, %v982
    %v999 = vmul.f32 %v935, %v983
    %1000 = vst [vmem:[#allocation14] sm:$0xff] %v984
    %1001 = vst [vmem:[#allocation14 + $0x8] sm:$0xff] %v985
    %1002 = vst [vmem:[#allocation14 + $0x10] sm:$0xff] %v986
    %1003 = vst [vmem:[#allocation14 + $0x18] sm:$0xff] %v987
    %1004 = vst [vmem:[#allocation14 + $0x20] sm:$0xff] %v988
    %1005 = vst [vmem:[#allocation14 + $0x28] sm:$0xff] %v989
    %1006 = vst [vmem:[#allocation14 + $0x30] sm:$0xff] %v990
    %1007 = vst [vmem:[#allocation14 + $0x38] sm:$0xff] %v991
    %1008 = vst [vmem:[#allocation14 + $0x40] sm:$0xff] %v992
    %1009 = vst [vmem:[#allocation14 + $0x48] sm:$0xff] %v993
    %1010 = vst [vmem:[#allocation14 + $0x50] sm:$0xff] %v994
    %1011 = vst [vmem:[#allocation14 + $0x58] sm:$0xff] %v995
    %1012 = vst [vmem:[#allocation14 + $0x60] sm:$0xff] %v996
    %1013 = vst [vmem:[#allocation14 + $0x68] sm:$0xff] %v997
    %1014 = vst [vmem:[#allocation14 + $0x70] sm:$0xff] %v998
    %1015 = vst [vmem:[#allocation14 + $0x78] sm:$0xff] %v999
    %1016 = vmatprep.subr.mxu0 0.0
    %1017 = vmatpush1.msra.mxu0 %v562
    %1018 = vmatprep.subr.mxu0 0.0
    %1019 = vmatpush1.msra.mxu0 %v567
    %1020 = vmatprep.subr.mxu0 0.0
    %1021 = vmatpush1.msra.mxu0 %v572
    %1022 = vmatprep.subr.mxu0 0.0
    %1023 = vmatpush1.msra.mxu0 %v577
    %1024 = vmatprep.subr.mxu0 0.0
    %1025 = vmatpush1.msra.mxu0 %v582
    %1026 = vmatprep.subr.mxu0 0.0
    %1027 = vmatpush1.msra.mxu0 %v587
    %1028 = vmatprep.subr.mxu0 0.0
    %1029 = vmatpush1.msra.mxu0 %v592
    %1030 = vmatprep.subr.mxu0 0.0
    %1031 = vmatpush1.msra.mxu0 %v597
    %1032 = vmatprep.subr.mxu0 0.0
    %1033 = vmatpush1.msra.mxu0 %v602
    %1034 = vmatprep.subr.mxu0 0.0
    %1035 = vmatpush1.msra.mxu0 %v607
    %1036 = vmatprep.subr.mxu0 0.0
    %1037 = vmatpush1.msra.mxu0 %v612
    %1038 = vmatprep.subr.mxu0 0.0
    %1039 = vmatpush1.msra.mxu0 %v617
    %1040 = vmatprep.subr.mxu0 0.0
    %1041 = vmatpush1.msra.mxu0 %v622
    %1042 = vmatprep.subr.mxu0 0.0
    %1043 = vmatpush1.msra.mxu0 %v627
    %1044 = vmatprep.subr.mxu0 0.0
    %1045 = vmatpush1.msra.mxu0 %v632
    %1046 = vmatprep.subr.mxu0 0.0
    %1047 = vmatpush1.msra.mxu0 %v637
    %1048 = vmatprep.subr.mxu0 0.0
    %1049 = vmatpush1.msra.mxu0 0.0
    %1050 = vmatprep.subr.mxu0 0.0
    %1051 = vmatpush1.msra.mxu0 0.0
    %1052 = vmatprep.subr.mxu0 0.0
    %1053 = vmatpush1.msra.mxu0 0.0
    %1054 = vmatprep.subr.mxu0 0.0
    %1055 = vmatpush1.msra.mxu0 0.0
    %1056 = vmatprep.subr.mxu0 0.0
    %1057 = vmatpush1.msra.mxu0 0.0
    %1058 = vmatprep.subr.mxu0 0.0
    %1059 = vmatpush1.msra.mxu0 0.0
    %1060 = vmatprep.subr.mxu0 0.0
    %1061 = vmatpush1.msra.mxu0 0.0
    %1062 = vmatprep.subr.mxu0 0.0
    %1063 = vmatpush1.msra.mxu0 0.0
    %1064 = vmatprep.subr.mxu0 0.0
    %1065 = vmatpush1.msra.mxu0 0.0
    %1066 = vmatprep.subr.mxu0 0.0
    %1067 = vmatpush1.msra.mxu0 0.0
    %1068 = vmatprep.subr.mxu0 0.0
    %1069 = vmatpush1.msra.mxu0 0.0
    %1070 = vmatprep.subr.mxu0 0.0
    %1071 = vmatpush1.msra.mxu0 0.0
    %1072 = vmatprep.subr.mxu0 0.0
    %1073 = vmatpush1.msra.mxu0 0.0
    %1074 = vmatprep.subr.mxu0 0.0
    %1075 = vmatpush1.msra.mxu0 0.0
    %1076 = vmatprep.subr.mxu0 0.0
    %1077 = vmatpush1.msra.mxu0 0.0
    %1078 = vmatprep.subr.mxu0 0.0
    %1079 = vmatpush1.msra.mxu0 0.0
    %1080 = vmatprep.mubr.f32.mxu0 0.0
    %1081 = vmatmul.mubr.f32.gmra.mrb[0].mxu0 %v984
    %v1082 = vpop.f32.mrb[0].mxu0
    %v1083 = vadd.f32 0.0, %v1082
    %v1084 = vpop.f32.mrb[0].mxu0
    %1085 = vmatprep.mubr.f32.mxu0 0.0
    %1086 = vmatmul.mubr.f32.gmra.mrb[0].mxu0 %v985
    %v1087 = vpop.f32.mrb[0].mxu0
    %v1088 = vadd.f32 0.0, %v1087
    %v1089 = vpop.f32.mrb[0].mxu0
    %1090 = vmatprep.mubr.f32.mxu0 0.0
    %1091 = vmatmul.mubr.f32.gmra.mrb[0].mxu0 %v986
    %v1092 = vpop.f32.mrb[0].mxu0
    %v1093 = vadd.f32 0.0, %v1092
    %v1094 = vpop.f32.mrb[0].mxu0
    %1095 = vmatprep.mubr.f32.mxu0 0.0
    %1096 = vmatmul.mubr.f32.gmra.mrb[0].mxu0 %v987
    %v1097 = vpop.f32.mrb[0].mxu0
    %v1098 = vadd.f32 0.0, %v1097
    %v1099 = vpop.f32.mrb[0].mxu0
    %1100 = vmatprep.mubr.f32.mxu0 0.0
    %1101 = vmatmul.mubr.f32.gmra.mrb[0].mxu0 %v988
    %v1102 = vpop.f32.mrb[0].mxu0
    %v1103 = vadd.f32 0.0, %v1102
    %v1104 = vpop.f32.mrb[0].mxu0
    %1105 = vmatprep.mubr.f32.mxu0 0.0
    %1106 = vmatmul.mubr.f32.gmra.mrb[0].mxu0 %v989
    %v1107 = vpop.f32.mrb[0].mxu0
    %v1108 = vadd.f32 0.0, %v1107
    %v1109 = vpop.f32.mrb[0].mxu0
    %1110 = vmatprep.mubr.f32.mxu0 0.0
    %1111 = vmatmul.mubr.f32.gmra.mrb[0].mxu0 %v990
    %v1112 = vpop.f32.mrb[0].mxu0
    %v1113 = vadd.f32 0.0, %v1112
    %v1114 = vpop.f32.mrb[0].mxu0
    %1115 = vmatprep.mubr.f32.mxu0 0.0
    %1116 = vmatmul.mubr.f32.gmra.mrb[0].mxu0 %v991
    %v1117 = vpop.f32.mrb[0].mxu0
    %v1118 = vadd.f32 0.0, %v1117
    %v1119 = vpop.f32.mrb[0].mxu0
    %1120 = vmatprep.mubr.f32.mxu0 0.0
    %1121 = vmatmul.mubr.f32.gmra.mrb[0].mxu0 %v992
    %v1122 = vpop.f32.mrb[0].mxu0
    %v1123 = vadd.f32 0.0, %v1122
    %v1124 = vpop.f32.mrb[0].mxu0
    %1125 = vmatprep.mubr.f32.mxu0 0.0
    %1126 = vmatmul.mubr.f32.gmra.mrb[0].mxu0 %v993
    %v1127 = vpop.f32.mrb[0].mxu0
    %v1128 = vadd.f32 0.0, %v1127
    %v1129 = vpop.f32.mrb[0].mxu0
    %1130 = vmatprep.mubr.f32.mxu0 0.0
    %1131 = vmatmul.mubr.f32.gmra.mrb[0].mxu0 %v994
    %v1132 = vpop.f32.mrb[0].mxu0
    %v1133 = vadd.f32 0.0, %v1132
    %v1134 = vpop.f32.mrb[0].mxu0
    %1135 = vmatprep.mubr.f32.mxu0 0.0
    %1136 = vmatmul.mubr.f32.gmra.mrb[0].mxu0 %v995
    %v1137 = vpop.f32.mrb[0].mxu0
    %v1138 = vadd.f32 0.0, %v1137
    %v1139 = vpop.f32.mrb[0].mxu0
    %1140 = vmatprep.mubr.f32.mxu0 0.0
    %1141 = vmatmul.mubr.f32.gmra.mrb[0].mxu0 %v996
    %v1142 = vpop.f32.mrb[0].mxu0
    %v1143 = vadd.f32 0.0, %v1142
    %v1144 = vpop.f32.mrb[0].mxu0
    %1145 = vmatprep.mubr.f32.mxu0 0.0
    %1146 = vmatmul.mubr.f32.gmra.mrb[0].mxu0 %v997
    %v1147 = vpop.f32.mrb[0].mxu0
    %v1148 = vadd.f32 0.0, %v1147
    %v1149 = vpop.f32.mrb[0].mxu0
    %1150 = vmatprep.mubr.f32.mxu0 0.0
    %1151 = vmatmul.mubr.f32.gmra.mrb[0].mxu0 %v998
    %v1152 = vpop.f32.mrb[0].mxu0
    %v1153 = vadd.f32 0.0, %v1152
    %v1154 = vpop.f32.mrb[0].mxu0
    %1155 = vmatprep.mubr.f32.mxu0 0.0
    %1156 = vmatmul.mubr.f32.gmra.mrb[0].mxu0 %v999
    %v1157 = vpop.f32.mrb[0].mxu0
    %v1158 = vadd.f32 0.0, %v1157
    %v1159 = vpop.f32.mrb[0].mxu0
    %1160 = vdwg.mxu0
    %1161 = vst [vmem:[#allocation13] sm:$0xff] %v1083
    %1162 = vst [vmem:[#allocation13 + $0x8] sm:$0xff] %v1088
    %1163 = vst [vmem:[#allocation13 + $0x10] sm:$0xff] %v1093
    %1164 = vst [vmem:[#allocation13 + $0x18] sm:$0xff] %v1098
    %1165 = vst [vmem:[#allocation13 + $0x20] sm:$0xff] %v1103
    %1166 = vst [vmem:[#allocation13 + $0x28] sm:$0xff] %v1108
    %1167 = vst [vmem:[#allocation13 + $0x30] sm:$0xff] %v1113
    %1168 = vst [vmem:[#allocation13 + $0x38] sm:$0xff] %v1118
    %1169 = vst [vmem:[#allocation13 + $0x40] sm:$0xff] %v1123
    %1170 = vst [vmem:[#allocation13 + $0x48] sm:$0xff] %v1128
    %1171 = vst [vmem:[#allocation13 + $0x50] sm:$0xff] %v1133
    %1172 = vst [vmem:[#allocation13 + $0x58] sm:$0xff] %v1138
    %1173 = vst [vmem:[#allocation13 + $0x60] sm:$0xff] %v1143
    %1174 = vst [vmem:[#allocation13 + $0x68] sm:$0xff] %v1148
    %1175 = vst [vmem:[#allocation13 + $0x70] sm:$0xff] %v1153
    %1176 = vst [vmem:[#allocation13 + $0x78] sm:$0xff] %v1158
    // Predicated region
    $region50: #{tpu_custom_call.1} parent=1 // pred_check
      _
    $region51: #{tpu_custom_call.1} parent=1 // pred_check_branch
      %1178 = sbr.rel (0) target = $region53
    $region52: #{tpu_custom_call.1} parent=1 // pred_region
      %s1180 = ssub.s32 2048, 2048
      %1181 = vsyncadd [#allocation4], %s1180
      %s1182 = sshll.u32 [#allocation13], 4
      %s1183 = int_to_ptr.vmem [resolvable:$true] %s1182
      %1188 = dma.vmem_to_hbm [thread:$0]  %s1183, 2048, %s6, [#allocation4], 128, 128, 8
    $region53: #{tpu_custom_call.1} parent=1 // pred_fallthru
      _
    // Predicated region
    $region54: #{tpu_custom_call.1} parent=1 // pred_check
      _
    $region55: #{tpu_custom_call.1} parent=1 // pred_check_branch
      %1190 = sbr.rel (0) target = $region57
    $region56: #{tpu_custom_call.1} parent=1 // pred_region
      %s1192 = ssub.s32 2048, 2048
      %1193 = vsyncadd [#allocation15], %s1192
      %s1194 = sshll.u32 [#allocation14], 4
      %s1195 = int_to_ptr.vmem [resolvable:$true] %s1194
      %1200 = dma.vmem_to_hbm [thread:$0]  %s1195, 2048, %s7, [#allocation15], 128, 128, 8
    $region57: #{tpu_custom_call.1} parent=1 // pred_fallthru
      _
    // Predicated region
    $region58: #{tpu_custom_call.1} parent=1 // pred_check
      _
    $region59: #{tpu_custom_call.1} parent=1 // pred_check_branch
      %1202 = sbr.rel (0) target = $region61
    $region60: #{tpu_custom_call.1} parent=1 // pred_region
      %1203 = dma.done [#allocation4], 2048
    $region61: #{tpu_custom_call.1} parent=1 // pred_fallthru
      _
    // Predicated region
    $region62: #{tpu_custom_call.1} parent=1 // pred_check
      _
    $region63: #{tpu_custom_call.1} parent=1 // pred_check_branch
      %1205 = sbr.rel (0) target = $region65
    $region64: #{tpu_custom_call.1} parent=1 // pred_region
      %1206 = dma.done [#allocation15], 2048
    $region65: #{tpu_custom_call.1} parent=1 // pred_fallthru
      _
    %1207 = vsyncpa [#allocation3], 1
    %1208 = vsyncpa [#allocation6], 1
    %1209 = vsyncpa [#allocation9], 1
    %1210 = vsyncpa [#allocation12], 1
    %1211 = vsyncpa [#allocation4], 1
    %1212 = vsyncpa [#allocation15], 1

</llo_original>
